<compile_context>
chip_gen: v7x
topology: tpu7x:2x2x1
jax: 0.10.0
libtpu: 0.0.40
codegen_flags: <defaults>
</compile_context>

<pallas_src>
import jax
import jax.numpy as jnp
from jax.experimental import pallas as pl
from jax.experimental.pallas import tpu as pltpu


def _conv3x3_kernel(xm_ref, xh_ref, w_ref, o_ref, acc_ref):
    # xm_ref:  (TH, W+2, C)   main rows of the zero-padded NHWC input tile
    # xh_ref:  (2,  W+2, C)   2-row bottom halo of the tile
    # w_ref :  (3, 3C, OC)    kw-folded conv weight (K index = kw*C + cin)
    # o_ref :  (TH*W, OC)     flattened conv-output tile
    # acc_ref: (TH*W, OC) f32 VMEM accumulator
    th = xm_ref.shape[0]
    wd = xm_ref.shape[1] - 2
    c3 = w_ref.shape[1]

    # (TH+2, W+2, C) row window: main block + 2 halo rows (leading-axis concat).
    xwin = jnp.concatenate([xm_ref[...], xh_ref[...]], axis=0)

    # Hoist the 3 width (sublane) shifts out of the kh loop and fold kw into
    # the contraction: K = 3C, 3 MXU matmuls per tile instead of 9.
    xcat = jnp.concatenate(
        [xwin[:, 0:wd, :], xwin[:, 1:wd + 1, :], xwin[:, 2:wd + 2, :]],
        axis=-1)                                        # (TH+2, W, 3C)

    for dh in range(3):
        xs = xcat[dh:dh + th].reshape(th * wd, c3)      # native dtype -> MXU
        part = jnp.dot(xs, w_ref[dh], preferred_element_type=jnp.float32)
        if dh == 0:
            acc_ref[...] = part
        else:
            acc_ref[...] += part

    o_ref[...] = acc_ref[...].astype(o_ref.dtype)


def _vmem_capacity_bytes(default=64 * 1024 * 1024):
    """Per-core VMEM capacity; conservative fallback if the query fails."""
    try:
        cap = getattr(pltpu.get_tpu_info(), "vmem_capacity_bytes", None)
        if cap:
            return int(cap)
    except Exception:
        pass
    return default


def _pick_row_tile(H, W, C, itemsize, budget_bytes):
    """Pick the output-row tile TH and the padded height H_pad.

    VMEM model per grid step: double-buffered main/halo/output blocks,
    (conservatively double-buffered) resident weight, f32 scratch accumulator,
    and the in-kernel concat temporaries.
    """
    OC = 2 * C

    def vmem_bytes(th):
        in_blk = 2 * th * (W + 2) * C * itemsize            # main block, 2 bufs
        halo_blk = 2 * 2 * (W + 2) * C * itemsize           # halo block, 2 bufs
        out_blk = 2 * th * W * OC * itemsize                # output block, 2 bufs
        w_blk = 2 * 3 * 3 * C * OC * itemsize               # weight (count 2x to be safe)
        acc = th * W * OC * 4                               # f32 accumulator scratch
        tmp = (th + 2) * (W + 2) * C * itemsize \
            + 2 * (th + 2) * W * 3 * C * itemsize           # xwin + xcat temporaries
        return in_blk + halo_blk + out_blk + w_blk + acc + tmp

    max_th = min(H, 1024)

    def ok(th):
        # Keep the output block's sublane dim 8-aligned (or full extent).
        return vmem_bytes(th) <= budget_bytes and ((th * W) % 8 == 0 or th == H)

    th_any = max((t for t in range(1, max_th + 1) if ok(t)), default=1)
    th_div = max((t for t in range(1, max_th + 1) if H % t == 0 and ok(t)),
                 default=1)

    # Prefer an exact divisor of H (no padded rows / no output crop) unless it
    # is much smaller than what fits (tiny tiles => per-step overhead dominates).
    if th_div * 2 >= th_any or th_div * W >= 1024:
        th = th_div
    else:
        th = max(8 * (th_any // 8), 1)

    H_pad = -(-H // th) * th
    if H_pad != th and (th * W) % 8 != 0:
        # Fall back to a single full-height tile so the output block's sublane
        # dim is the full array extent.
        th, H_pad = H, H
    return th, H_pad


def upsample(x, weight):
    """x: (B, C, H, W); weight: (2C, C, 3, 3) PyTorch OIHW, bias-free.
    Returns (B, C//2, 2H, 2W) = PixelShuffle(2)(Conv2d(C, 2C, 3, 1, 1)(x))."""
    B, C, H, W = x.shape
    OC = 2 * C
    assert weight.shape == (OC, C, 3, 3)
    assert C % 2 == 0, "PixelShuffle(2) needs conv output channels divisible by 4"
    Cq = C // 2

    itemsize = jnp.dtype(x.dtype).itemsize
    vmem_cap = _vmem_capacity_bytes()
    th, H_pad = _pick_row_tile(H, W, C, itemsize,
                               budget_bytes=int(0.45 * vmem_cap))
    s_tiles = H_pad // th

    # ---- layout prep: one fused XLA copy of the input, no window duplication ----
    x_nhwc = jnp.transpose(x, (0, 2, 3, 1))                       # (B, H, W, C)
    x_pad = jnp.pad(x_nhwc,
                    ((0, 0), (1, 1 + (H_pad - H)), (1, 1), (0, 0)))  # (B, H_pad+2, W+2, C)
    # Only the 2 bottom-halo rows per tile are duplicated in HBM (tiny).
    x_halo = jnp.stack(
        [x_pad[:, (s + 1) * th:(s + 1) * th + 2] for s in range(s_tiles)],
        axis=1)                                                   # (B, S, 2, W+2, C)

    # Weight: OIHW -> (kh, kw, Cin, Cout) -> kw folded into K: (3, 3C, OC).
    # Output-channel order kept as PyTorch's (needed for PixelShuffle below).
    w_k = jnp.transpose(weight, (2, 3, 1, 0)).reshape(3, 3 * C, OC)

    conv_flat = pl.pallas_call(
        _conv3x3_kernel,
        out_shape=jax.ShapeDtypeStruct((B, H_pad * W, OC), x.dtype),
        grid_spec=pltpu.PrefetchScalarGridSpec(
            num_scalar_prefetch=0,
            grid=(B, s_tiles),
            in_specs=[
                # Disjoint main row blocks of the padded image (auto-pipelined).
                pl.BlockSpec((None, th, W + 2, C), lambda b, s: (b, s, 0, 0)),
                # 2-row bottom halo per tile.
                pl.BlockSpec((None, None, 2, W + 2, C),
                             lambda b, s: (b, s, 0, 0, 0)),
                # kw-folded weight, constant index -> stays VMEM resident.
                pl.BlockSpec((3, 3 * C, OC), lambda b, s: (0, 0, 0)),
            ],
            out_specs=pl.BlockSpec((None, th * W, OC), lambda b, s: (b, s, 0)),
            scratch_shapes=[pltpu.VMEM((th * W, OC), jnp.float32)],
        ),
        compiler_params=pltpu.CompilerParams(
            dimension_semantics=("parallel", "parallel"),
            vmem_limit_bytes=int(0.9 * vmem_cap),
        ),
    )(x_pad, x_halo, w_k)

    # ---- PixelShuffle(2) + back to NCHW in one fused XLA reshape/transpose ----
    # conv channel o = 4*c + 2*i + j  ->  out[b, c, 2h+i, 2w+j]
    z = conv_flat.reshape(B, H_pad, W, Cq, 2, 2)
    out = jnp.transpose(z, (0, 3, 1, 4, 2, 5)).reshape(B, Cq, 2 * H_pad, 2 * W)
    if H_pad != H:
        out = out[:, :, :2 * H, :]
    return out


def upsample_ref(x, weight):
    """Pure-JAX reference: lax conv + PixelShuffle(2)."""
    y = jax.lax.conv_general_dilated(
        x, weight, window_strides=(1, 1), padding=((1, 1), (1, 1)),
        dimension_numbers=("NCHW", "OIHW", "NCHW"),
        precision=jax.lax.Precision.HIGHEST)
    B, O, H, W = y.shape
    c = O // 4
    y = y.reshape(B, c, 2, 2, H, W)
    return jnp.transpose(y, (0, 1, 4, 2, 5, 3)).reshape(B, c, 2 * H, 2 * W)


if __name__ == "__main__":
    key = jax.random.PRNGKey(0)
    kx, kw = jax.random.split(key)

    B, C, H, W = 2, 4, 16, 16                     # n_feat = 4
    x = jax.random.normal(kx, (B, C, H, W), dtype=jnp.float32)
    weight = 0.1 * jax.random.normal(kw, (2 * C, C, 3, 3), dtype=jnp.float32)

    out = jax.block_until_ready(upsample(x, weight))
    ref = upsample_ref(x, weight)

    assert out.shape == (B, C // 2, 2 * H, 2 * W), out.shape
    max_err = float(jnp.max(jnp.abs(out - ref)))
    assert jnp.allclose(out, ref, atol=1e-3, rtol=1e-3), f"max abs err = {max_err}"
    print("KERNEL_OK")
</pallas_src>

<mosaic_0001>
module attributes {stable_mosaic.version = 11 : i64} {
  func.func @_conv3x3_kernel(%arg0: i32, %arg1: i32, %arg2: memref<1x16x18x4xf32, #tpu.memory_space<vmem>>, %arg3: memref<1x1x2x18x4xf32, #tpu.memory_space<vmem>>, %arg4: memref<3x12x8xf32, #tpu.memory_space<vmem>>, %arg5: memref<1x256x8xf32, #tpu.memory_space<vmem>>, %arg6: memref<256x8xf32, #tpu.memory_space<vmem>>) attributes {dimension_semantics = [#tpu.dimension_semantics<parallel>, #tpu.dimension_semantics<parallel>], iteration_bounds = array<i64: 2, 1>, scalar_prefetch = 0 : i64, scratch_operands = 1 : i64, tpu.core_type = #tpu.core_type<tc>, window_params = [{transform_indices = @transform_0, window_bounds = array<i64: 1, 16, 18, 4>}, {transform_indices = @transform_1, window_bounds = array<i64: 1, 1, 2, 18, 4>}, {pipeline_mode = #tpu.pipeline_mode<synchronous>, transform_indices = @transform_2, window_bounds = array<i64: 3, 12, 8>}, {transform_indices = @transform_3, window_bounds = array<i64: 1, 256, 8>}]} {
    %c0 = arith.constant 0 : index
    %c0_0 = arith.constant 0 : index
    %c0_1 = arith.constant 0 : index
    %c0_2 = arith.constant 0 : index
    %0 = vector.load %arg2[%c0, %c0_0, %c0_1, %c0_2] : memref<1x16x18x4xf32, #tpu.memory_space<vmem>>, vector<1x16x18x4xf32>
    %1 = vector.shape_cast %0 : vector<1x16x18x4xf32> to vector<16x18x4xf32>
    %c0_3 = arith.constant 0 : index
    %c0_4 = arith.constant 0 : index
    %c0_5 = arith.constant 0 : index
    %c0_6 = arith.constant 0 : index
    %c0_7 = arith.constant 0 : index
    %2 = vector.load %arg3[%c0_3, %c0_4, %c0_5, %c0_6, %c0_7] : memref<1x1x2x18x4xf32, #tpu.memory_space<vmem>>, vector<1x1x2x18x4xf32>
    %3 = vector.shape_cast %2 : vector<1x1x2x18x4xf32> to vector<2x18x4xf32>
    %4 = tpu.concatenate %1, %3 in 0 : vector<16x18x4xf32>, vector<2x18x4xf32> -> vector<18x18x4xf32>
    %5 = vector.extract_strided_slice %4 {offsets = [0, 0, 0], sizes = [18, 16, 4], strides = [1, 1, 1]} : vector<18x18x4xf32> to vector<18x16x4xf32>
    %6 = vector.extract_strided_slice %4 {offsets = [0, 1, 0], sizes = [18, 16, 4], strides = [1, 1, 1]} : vector<18x18x4xf32> to vector<18x16x4xf32>
    %7 = vector.extract_strided_slice %4 {offsets = [0, 2, 0], sizes = [18, 16, 4], strides = [1, 1, 1]} : vector<18x18x4xf32> to vector<18x16x4xf32>
    %8 = tpu.concatenate %5, %6, %7 in 2 : vector<18x16x4xf32>, vector<18x16x4xf32>, vector<18x16x4xf32> -> vector<18x16x12xf32>
    %9 = vector.extract_strided_slice %8 {offsets = [0, 0, 0], sizes = [16, 16, 12], strides = [1, 1, 1]} : vector<18x16x12xf32> to vector<16x16x12xf32>
    %10 = vector.shape_cast %9 : vector<16x16x12xf32> to vector<256x12xf32>
    %c0_8 = arith.constant 0 : index
    %c0_9 = arith.constant 0 : index
    %c0_10 = arith.constant 0 : index
    %11 = vector.load %arg4[%c0_8, %c0_9, %c0_10] : memref<3x12x8xf32, #tpu.memory_space<vmem>>, vector<1x12x8xf32>
    %12 = vector.shape_cast %11 : vector<1x12x8xf32> to vector<12x8xf32>
    %cst = arith.constant dense<0.000000e+00> : vector<256x8xf32>
    %13 = tpu.matmul %10, %12, %cst {dimension_numbers = #tpu.dot_dimension_numbers<[1], [0], [0], [1], [0, 0, 1, 1], [], []>} : vector<256x12xf32>, vector<12x8xf32>, vector<256x8xf32> -> vector<256x8xf32>
    %c0_11 = arith.constant 0 : index
    %c0_12 = arith.constant 0 : index
    %14 = vector.load %arg6[%c0_11, %c0_12] : memref<256x8xf32, #tpu.memory_space<vmem>>, vector<256x8xf32>
    tpu.vector_store %arg6[%c0_11, %c0_12], %13 {strides = array<i32>} : memref<256x8xf32, #tpu.memory_space<vmem>>, vector<256x8xf32>,
    %15 = vector.extract_strided_slice %8 {offsets = [1, 0, 0], sizes = [16, 16, 12], strides = [1, 1, 1]} : vector<18x16x12xf32> to vector<16x16x12xf32>
    %16 = vector.shape_cast %15 : vector<16x16x12xf32> to vector<256x12xf32>
    %c1 = arith.constant 1 : index
    %c0_13 = arith.constant 0 : index
    %c0_14 = arith.constant 0 : index
    %17 = vector.load %arg4[%c1, %c0_13, %c0_14] : memref<3x12x8xf32, #tpu.memory_space<vmem>>, vector<1x12x8xf32>
    %18 = vector.shape_cast %17 : vector<1x12x8xf32> to vector<12x8xf32>
    %cst_15 = arith.constant dense<0.000000e+00> : vector<256x8xf32>
    %19 = tpu.matmul %16, %18, %cst_15 {dimension_numbers = #tpu.dot_dimension_numbers<[1], [0], [0], [1], [0, 0, 1, 1], [], []>} : vector<256x12xf32>, vector<12x8xf32>, vector<256x8xf32> -> vector<256x8xf32>
    %c0_16 = arith.constant 0 : index
    %c0_17 = arith.constant 0 : index
    %20 = vector.load %arg6[%c0_16, %c0_17] : memref<256x8xf32, #tpu.memory_space<vmem>>, vector<256x8xf32>
    %21 = arith.addf %20, %19 : vector<256x8xf32>
    %c0_18 = arith.constant 0 : index
    %c0_19 = arith.constant 0 : index
    %22 = vector.load %arg6[%c0_18, %c0_19] : memref<256x8xf32, #tpu.memory_space<vmem>>, vector<256x8xf32>
    tpu.vector_store %arg6[%c0_18, %c0_19], %21 {strides = array<i32>} : memref<256x8xf32, #tpu.memory_space<vmem>>, vector<256x8xf32>,
    %23 = vector.extract_strided_slice %8 {offsets = [2, 0, 0], sizes = [16, 16, 12], strides = [1, 1, 1]} : vector<18x16x12xf32> to vector<16x16x12xf32>
    %24 = vector.shape_cast %23 : vector<16x16x12xf32> to vector<256x12xf32>
    %c2 = arith.constant 2 : index
    %c0_20 = arith.constant 0 : index
    %c0_21 = arith.constant 0 : index
    %25 = vector.load %arg4[%c2, %c0_20, %c0_21] : memref<3x12x8xf32, #tpu.memory_space<vmem>>, vector<1x12x8xf32>
    %26 = vector.shape_cast %25 : vector<1x12x8xf32> to vector<12x8xf32>
    %cst_22 = arith.constant dense<0.000000e+00> : vector<256x8xf32>
    %27 = tpu.matmul %24, %26, %cst_22 {dimension_numbers = #tpu.dot_dimension_numbers<[1], [0], [0], [1], [0, 0, 1, 1], [], []>} : vector<256x12xf32>, vector<12x8xf32>, vector<256x8xf32> -> vector<256x8xf32>
    %c0_23 = arith.constant 0 : index
    %c0_24 = arith.constant 0 : index
    %28 = vector.load %arg6[%c0_23, %c0_24] : memref<256x8xf32, #tpu.memory_space<vmem>>, vector<256x8xf32>
    %29 = arith.addf %28, %27 : vector<256x8xf32>
    %c0_25 = arith.constant 0 : index
    %c0_26 = arith.constant 0 : index
    %30 = vector.load %arg6[%c0_25, %c0_26] : memref<256x8xf32, #tpu.memory_space<vmem>>, vector<256x8xf32>
    tpu.vector_store %arg6[%c0_25, %c0_26], %29 {strides = array<i32>} : memref<256x8xf32, #tpu.memory_space<vmem>>, vector<256x8xf32>,
    %c0_27 = arith.constant 0 : index
    %c0_28 = arith.constant 0 : index
    %31 = vector.load %arg6[%c0_27, %c0_28] : memref<256x8xf32, #tpu.memory_space<vmem>>, vector<256x8xf32>
    %c0_29 = arith.constant 0 : index
    %c0_30 = arith.constant 0 : index
    %c0_31 = arith.constant 0 : index
    %32 = vector.load %arg5[%c0_29, %c0_30, %c0_31] : memref<1x256x8xf32, #tpu.memory_space<vmem>>, vector<1x256x8xf32>
    %33 = vector.shape_cast %32 : vector<1x256x8xf32> to vector<256x8xf32>
    %34 = vector.shape_cast %31 : vector<256x8xf32> to vector<1x256x8xf32>
    tpu.vector_store %arg5[%c0_29, %c0_30, %c0_31], %34 {strides = array<i32>} : memref<1x256x8xf32, #tpu.memory_space<vmem>>, vector<1x256x8xf32>,
    return
  }
  func.func @transform_0(%arg0: i32, %arg1: i32) -> (i32, i32, i32, i32) {
    %c0_i32 = arith.constant 0 : i32
    %c0_i32_0 = arith.constant 0 : i32
    %c0_i32_1 = arith.constant 0 : i32
    return %arg0, %arg1, %c0_i32, %c0_i32_0 : i32, i32, i32, i32
  }
  func.func @transform_1(%arg0: i32, %arg1: i32) -> (i32, i32, i32, i32, i32) {
    %c0_i32 = arith.constant 0 : i32
    %c0_i32_0 = arith.constant 0 : i32
    %c0_i32_1 = arith.constant 0 : i32
    %c0_i32_2 = arith.constant 0 : i32
    return %arg0, %arg1, %c0_i32, %c0_i32_0, %c0_i32_1 : i32, i32, i32, i32, i32
  }
  func.func @transform_2(%arg0: i32, %arg1: i32) -> (i32, i32, i32) {
    %c0_i32 = arith.constant 0 : i32
    %c0_i32_0 = arith.constant 0 : i32
    %c0_i32_1 = arith.constant 0 : i32
    %c0_i32_2 = arith.constant 0 : i32
    return %c0_i32, %c0_i32_0, %c0_i32_1 : i32, i32, i32
  }
  func.func @transform_3(%arg0: i32, %arg1: i32) -> (i32, i32, i32) {
    %c0_i32 = arith.constant 0 : i32
    %c0_i32_0 = arith.constant 0 : i32
    return %arg0, %arg1, %c0_i32 : i32, i32, i32
  }
}

</mosaic_0001>

<llo_original>
// kernel: tpu_custom_call.1
$region0: #{tpu_custom_call.1}
  #allocation0 [shape = 'u32[]', space=smem, size = 0x4, offset = 0x4, fixed_abs, tag = 'smem constant byte address 0x4 - core index']
  #allocation1 [shape = 'u32[144,128]{1,0:T(1,128)}', space=vmem, size = 0x12000, scoped, tag = 'internal scratch']
  #allocation2 [shape = 'f32[256,8]{1,0:T(8,128)}', space=vmem, size = 0x20000, scoped, tag = 'scratch operand']
  %s0 = inlined_call_operand.vmem [shape: f32[2,18,18,4], index: 0, kind: input, shape index: {}]
  %s1 = inlined_call_operand.vmem [shape: f32[2,1,2,18,4], index: 1, kind: input, shape index: {}]
  %s2 = inlined_call_operand.vmem [shape: f32[3,12,8], index: 2, kind: input, shape index: {}]
  %s3 = inlined_call_operand.vmem [shape: f32[2,256,8], index: 3, kind: output, shape index: {}]
  %s4 = sld [smem:[#allocation0]]
  $region45: #{tpu_custom_call.1} parent=0
    _
  %s6 = ssub.s32 1, %s4
  %s7 = scalar_select 0, %s6, %s4
  loop: start=0, step=1, limit=4
  $region2: #{tpu_custom_call.1} parent=0 // loop_pre_header
    _
  $region3: #{tpu_custom_call.1} parent=0 // loop_header
    %s9 = sphi 0, %s13
    %p10 = scmp.ge.s32.totalorder %s9, 4
    %s16 = sphi 0, %s28
    %s17 = sphi 0, %s24
    %s18 = sphi 0, %s16
    %s19 = sphi 0, %s17
    %s20 = sphi 0, %s18
    %s21 = sphi 0, %s19
    %s33 = sphi 0, %s35
    %s36 = sphi 0, %s33
    %s37 = sphi 0, %s36
    %s53 = sphi 0, %s37
    %s61 = sphi 0, %s63
    %s64 = sphi 0, %s61
    %s65 = sphi 0, %s64
    %s81 = sphi 0, %s65
    %s85 = sphi 0, %s85
    %s87 = sphi 0, %s85
    %s88 = sphi 0, %s87
    %s102 = sphi 0, %s88
    %s110 = sphi 0, %s112
    %s113 = sphi 0, %s110
    %s114 = sphi 0, %s113
    %s130 = sphi 0, %s114
  $region4: #{tpu_custom_call.1} parent=0 // loop_header_branch
    %12 = sbr.rel (%p10) target = $region8
  $region5: #{tpu_custom_call.1} parent=0 // loop_body
    %s14 = ssub.s32 %s9, 1
    %s15 = ssub.s32 %s9, 2
    %s22 = sadd.s32 1, %s17
    %p23 = scmp.ge.s32.totalorder %s22, 1
    %s24 = scalar_select %p23, 0, %s22
    %s25 = sadd.s32 1, %s16
    %s26 = scalar_select %p23, %s25, %s16
    %p27 = scmp.ge.s32.totalorder %s26, 2
    %s28 = scalar_select %p27, 0, %s26
    %s29 = ssub.s32 %s16, %s28
    %s30 = ssub.s32 %s17, %s24
    %s31 = sor.u32 %s29, %s30
    %p32 = scmp.eq.s32.totalorder %s31, 0
    %s34 = sadd.s32 %s33, 1
    %s35 = scalar_select %p32, %s33, %s34
    %p38 = pneg %p32
    %p39 = scmp.eq.s32.totalorder %s9, 1
    %p40 = por %p38, %p39
    %p41 = scmp.ne.s32.totalorder %s33, %s36
    %p42 = scmp.eq.s32.totalorder %s9, 0
    %p43 = por %p41, %p42
    %p44 = scmp.ne.s32.totalorder %s33, %s36
    %p45 = scmp.eq.s32.totalorder %s14, 1
    %p46 = por %p44, %p45
    %p47 = scmp.ne.s32.totalorder %s36, %s37
    %p48 = scmp.eq.s32.totalorder %s14, 0
    %p49 = por %p47, %p48
    %p50 = scmp.ne.s32.totalorder %s36, %s37
    %p51 = scmp.eq.s32.totalorder %s15, 1
    %p52 = por %p50, %p51
    %p54 = scmp.ne.s32.totalorder %s37, %s53
    %p55 = scmp.eq.s32.totalorder %s15, 0
    %p56 = por %p54, %p55
    %s57 = ssub.s32 %s16, %s28
    %s58 = ssub.s32 %s17, %s24
    %s59 = sor.u32 %s57, %s58
    %p60 = scmp.eq.s32.totalorder %s59, 0
    %s62 = sadd.s32 %s61, 1
    %s63 = scalar_select %p60, %s61, %s62
    %p66 = pneg %p60
    %p67 = scmp.eq.s32.totalorder %s9, 1
    %p68 = por %p66, %p67
    %p69 = scmp.ne.s32.totalorder %s61, %s64
    %p70 = scmp.eq.s32.totalorder %s9, 0
    %p71 = por %p69, %p70
    %p72 = scmp.ne.s32.totalorder %s61, %s64
    %p73 = scmp.eq.s32.totalorder %s14, 1
    %p74 = por %p72, %p73
    %p75 = scmp.ne.s32.totalorder %s64, %s65
    %p76 = scmp.eq.s32.totalorder %s14, 0
    %p77 = por %p75, %p76
    %p78 = scmp.ne.s32.totalorder %s64, %s65
    %p79 = scmp.eq.s32.totalorder %s15, 1
    %p80 = por %p78, %p79
    %p82 = scmp.ne.s32.totalorder %s65, %s81
    %p83 = scmp.eq.s32.totalorder %s15, 0
    %p84 = por %p82, %p83
    %s86 = sadd.s32 %s85, 1
    %p89 = scmp.eq.s32.totalorder %s9, 1
    %p90 = scmp.ne.s32.totalorder %s85, %s87
    %p91 = scmp.eq.s32.totalorder %s9, 0
    %p92 = por %p90, %p91
    %p93 = scmp.ne.s32.totalorder %s85, %s87
    %p94 = scmp.eq.s32.totalorder %s14, 1
    %p95 = por %p93, %p94
    %p96 = scmp.ne.s32.totalorder %s87, %s88
    %p97 = scmp.eq.s32.totalorder %s14, 0
    %p98 = por %p96, %p97
    %p99 = scmp.ne.s32.totalorder %s87, %s88
    %p100 = scmp.eq.s32.totalorder %s15, 1
    %p101 = por %p99, %p100
    %p103 = scmp.ne.s32.totalorder %s88, %s102
    %p104 = scmp.eq.s32.totalorder %s15, 0
    %p105 = por %p103, %p104
    %s106 = ssub.s32 %s16, %s28
    %s107 = ssub.s32 %s17, %s24
    %s108 = sor.u32 %s106, %s107
    %p109 = scmp.eq.s32.totalorder %s108, 0
    %s111 = sadd.s32 %s110, 1
    %s112 = scalar_select %p109, %s110, %s111
    %p115 = pneg %p109
    %p116 = scmp.eq.s32.totalorder %s9, 1
    %p117 = por %p115, %p116
    %p118 = scmp.ne.s32.totalorder %s110, %s113
    %p119 = scmp.eq.s32.totalorder %s9, 0
    %p120 = por %p118, %p119
    %p121 = scmp.ne.s32.totalorder %s110, %s113
    %p122 = scmp.eq.s32.totalorder %s14, 1
    %p123 = por %p121, %p122
    %p124 = scmp.ne.s32.totalorder %s113, %s114
    %p125 = scmp.eq.s32.totalorder %s14, 0
    %p126 = por %p124, %p125
    %p127 = scmp.ne.s32.totalorder %s113, %s114
    %p128 = scmp.eq.s32.totalorder %s15, 1
    %p129 = por %p127, %p128
    %p131 = scmp.ne.s32.totalorder %s114, %s130
    %p132 = scmp.eq.s32.totalorder %s15, 0
    %p133 = por %p131, %p132
    %p134 = scmp.le.s32.totalorder 1, %s9
    %p135 = scmp.lt.s32.totalorder %s9, 3
    %p136 = pnand %p134, %p135
    %p137 = pneg %p136
    // Predicated region
    $region9: #{tpu_custom_call.1} parent=5 // pred_check
      _
    $region10: #{tpu_custom_call.1} parent=5 // pred_check_branch
      %139 = sbr.rel (%p136) target = $region12
    $region11: #{tpu_custom_call.1} parent=5 // pred_region
      %s140 = ssub.s32 %s9, 1
      // Predicated region
      $region13: #{tpu_custom_call.1} parent=11 // pred_check
        %p141 = pneg %p98
      $region14: #{tpu_custom_call.1} parent=11 // pred_check_branch
        %143 = sbr.rel (%p141) target = $region16
      $region15: #{tpu_custom_call.1} parent=11 // pred_region
        _
      $region16: #{tpu_custom_call.1} parent=11 // pred_fallthru
        _
    $region12: #{tpu_custom_call.1} parent=5 // pred_fallthru
      _
    %p144 = scmp.lt.s32.totalorder %s9, 2
    // Predicated region
    $region17: #{tpu_custom_call.1} parent=5 // pred_check
      %p145 = pneg %p144
    $region18: #{tpu_custom_call.1} parent=5 // pred_check_branch
      %147 = sbr.rel (%p145) target = $region20
    $region19: #{tpu_custom_call.1} parent=5 // pred_region
      // Predicated region
      $region21: #{tpu_custom_call.1} parent=19 // pred_check
        %p148 = pneg %p43
      $region22: #{tpu_custom_call.1} parent=19 // pred_check_branch
        %150 = sbr.rel (%p148) target = $region24
      $region23: #{tpu_custom_call.1} parent=19 // pred_region
        %s151 = smul.u32 16, %s17
        %s152 = ssub.s32 18, %s151
        %p153 = scmp.lt.s32.totalorder %s152, 16
        %s154 = scalar_select %p153, %s152, 16
        %s155 = smul.u32 128, %s154
        %s156 = smul.u32 %s155, 3
        %p157 = scmp.lt.s32.totalorder %s16, 1
        %s158 = scalar_select %p157, %s16, 1
        %p159 = scmp.lt.s32.totalorder %s151, 17
        %s160 = scalar_select %p159, %s151, 17
        %s161 = smul.addr %s160, 3
        %s162 = smul.addr %s158, 54
        %s163 = sadd.s32 %s161, %s162
        %s164 = smul.addr %s163, 8
        %s165 = scalar_lea.vmem %s0, %s164
        %s166 = smul.u32 16, %s17
        %s167 = ssub.s32 18, %s166
        %p168 = scmp.lt.s32.totalorder %s167, 16
        %s169 = scalar_select %p168, %s167, 16
        %s170 = smul.u32 128, %s169
        %s171 = smul.u32 %s170, 3
      $region24: #{tpu_custom_call.1} parent=19 // pred_fallthru
        _
      // Predicated region
      $region25: #{tpu_custom_call.1} parent=19 // pred_check
        %p172 = pneg %p71
      $region26: #{tpu_custom_call.1} parent=19 // pred_check_branch
        %174 = sbr.rel (%p172) target = $region28
      $region27: #{tpu_custom_call.1} parent=19 // pred_region
        %p175 = scmp.lt.s32.totalorder %s16, 1
        %s176 = scalar_select %p175, %s16, 1
        %p177 = scmp.lt.s32.totalorder %s17, 0
        %s178 = scalar_select %p177, %s17, 0
        %s179 = smul.addr %s178, 6
        %s180 = smul.addr %s176, 6
        %s181 = sadd.s32 %s179, %s180
        %s182 = smul.addr %s181, 8
        %s183 = scalar_lea.vmem %s1, %s182
      $region28: #{tpu_custom_call.1} parent=19 // pred_fallthru
        _
    $region20: #{tpu_custom_call.1} parent=5 // pred_fallthru
      _
    %p184 = scmp.le.s32.totalorder 1, %s9
    %p185 = scmp.lt.s32.totalorder %s9, 3
    %p186 = pnand %p184, %p185
    %p187 = pneg %p186
    // Predicated region
    $region29: #{tpu_custom_call.1} parent=5 // pred_check
      _
    $region30: #{tpu_custom_call.1} parent=5 // pred_check_branch
      %189 = sbr.rel (%p186) target = $region32
    $region31: #{tpu_custom_call.1} parent=5 // pred_region
      %s190 = ssub.s32 %s9, 1
      %s191 = smul.u32 16, %s19
      %s192 = ssub.s32 18, %s191
      %p193 = scmp.lt.s32.totalorder %s192, 16
      %s194 = scalar_select %p193, %s192, 16
      %s195 = smul.u32 128, %s194
      %s196 = smul.u32 %s195, 3
      %p197 = scmp.lt.s32.totalorder %s18, 1
      %s198 = scalar_select %p197, %s18, 1
      %p199 = scmp.lt.s32.totalorder %s191, 17
      %s200 = scalar_select %p199, %s191, 17
      %s201 = smul.addr %s200, 3
      %s202 = smul.addr %s198, 54
      %s203 = sadd.s32 %s201, %s202
      %s204 = smul.addr %s203, 8
      %s205 = scalar_lea.vmem %s0, %s204
      %p206 = pneg %p49
      %p207 = pneg %p46
      %p208 = scmp.lt.s32.totalorder %s18, 1
      %s209 = scalar_select %p208, %s18, 1
      %p210 = scmp.lt.s32.totalorder %s19, 0
      %s211 = scalar_select %p210, %s19, 0
      %s212 = smul.addr %s211, 6
      %s213 = smul.addr %s209, 6
      %s214 = sadd.s32 %s212, %s213
      %s215 = smul.addr %s214, 8
      %s216 = scalar_lea.vmem %s1, %s215
      %p217 = pneg %p77
      %p218 = pneg %p74
      %p219 = pneg %p98
      %p220 = pneg %p95
      %p221 = pneg %p126
      %p222 = pneg %p123
      %s223 = smul.u32 32, %s19
      %p224 = scmp.lt.s32.totalorder %s18, 1
      %s225 = scalar_select %p224, %s18, 1
      %p226 = scmp.lt.s32.totalorder %s223, 31
      %s227 = scalar_select %p226, %s223, 31
      %s228 = smul.addr %s225, 32
      %s229 = sadd.s32 %s227, %s228
      %s230 = smul.addr %s229, 8
      %s231 = scalar_lea.vmem %s3, %s230
      %s232 = smul.u32 16, %s19
      %s233 = ssub.s32 18, %s232
      %p234 = scmp.lt.s32.totalorder %s233, 16
      %s235 = scalar_select %p234, %s233, 16
      %s236 = smul.u32 128, %s235
      %s237 = smul.u32 %s236, 3
      %p238 = scmp.lt.s32.totalorder %s18, 1
      %s239 = scalar_select %p238, %s18, 1
      %p240 = scmp.lt.s32.totalorder %s232, 17
      %s241 = scalar_select %p240, %s232, 17
      %s242 = smul.addr %s241, 3
      %s243 = smul.addr %s239, 54
      %s244 = sadd.s32 %s242, %s243
      %s245 = smul.addr %s244, 8
      %s246 = scalar_lea.vmem %s0, %s245
      %s247 = smul.u32 16, %s19
      %s248 = ssub.s32 18, %s247
      %p249 = scmp.lt.s32.totalorder %s248, 16
      %s250 = scalar_select %p249, %s248, 16
      %s251 = smul.u32 128, %s250
      %s252 = smul.u32 %s251, 3
      %p253 = scmp.lt.s32.totalorder %s18, 1
      %s254 = scalar_select %p253, %s18, 1
      %p255 = scmp.lt.s32.totalorder %s19, 0
      %s256 = scalar_select %p255, %s19, 0
      %s257 = smul.addr %s256, 6
      %s258 = smul.addr %s254, 6
      %s259 = sadd.s32 %s257, %s258
      %s260 = smul.addr %s259, 8
      %s261 = scalar_lea.vmem %s1, %s260
      %s262 = smul.u32 32, %s19
      %p263 = scmp.lt.s32.totalorder %s18, 1
      %s264 = scalar_select %p263, %s18, 1
      %p265 = scmp.lt.s32.totalorder %s262, 31
      %s266 = scalar_select %p265, %s262, 31
      %s267 = smul.addr %s264, 32
      %s268 = sadd.s32 %s266, %s267
      %s269 = smul.addr %s268, 8
      %s270 = scalar_lea.vmem %s3, %s269
      %s271 = smul.u32 32, %s19
      %v272 = vld [vmem:[%s246] sm:$0xff]
      %v273 = vld [vmem:[%s246 + $0x8] sm:$0xff]
      %v274 = vld [vmem:[%s246 + $0x10] sm:$0x3]
      %v275 = vld [vmem:[%s246 + $0x18] sm:$0xff]
      %v276 = vld [vmem:[%s246 + $0x20] sm:$0xff]
      %v277 = vld [vmem:[%s246 + $0x28] sm:$0x3]
      %v278 = vld [vmem:[%s246 + $0x30] sm:$0xff]
      %v279 = vld [vmem:[%s246 + $0x38] sm:$0xff]
      %v280 = vld [vmem:[%s246 + $0x40] sm:$0x3]
      %v281 = vld [vmem:[%s246 + $0x48] sm:$0xff]
      %v282 = vld [vmem:[%s246 + $0x50] sm:$0xff]
      %v283 = vld [vmem:[%s246 + $0x58] sm:$0x3]
      %v284 = vld [vmem:[%s246 + $0x60] sm:$0xff]
      %v285 = vld [vmem:[%s246 + $0x68] sm:$0xff]
      %v286 = vld [vmem:[%s246 + $0x70] sm:$0x3]
      %v287 = vld [vmem:[%s246 + $0x78] sm:$0xff]
      %v288 = vld [vmem:[%s246 + $0x80] sm:$0xff]
      %v289 = vld [vmem:[%s246 + $0x88] sm:$0x3]
      %v290 = vld [vmem:[%s246 + $0x90] sm:$0xff]
      %v291 = vld [vmem:[%s246 + $0x98] sm:$0xff]
      %v292 = vld [vmem:[%s246 + $0xa0] sm:$0x3]
      %v293 = vld [vmem:[%s246 + $0xa8] sm:$0xff]
      %v294 = vld [vmem:[%s246 + $0xb0] sm:$0xff]
      %v295 = vld [vmem:[%s246 + $0xb8] sm:$0x3]
      %v296 = vld [vmem:[%s246 + $0xc0] sm:$0xff]
      %v297 = vld [vmem:[%s246 + $0xc8] sm:$0xff]
      %v298 = vld [vmem:[%s246 + $0xd0] sm:$0x3]
      %v299 = vld [vmem:[%s246 + $0xd8] sm:$0xff]
      %v300 = vld [vmem:[%s246 + $0xe0] sm:$0xff]
      %v301 = vld [vmem:[%s246 + $0xe8] sm:$0x3]
      %v302 = vld [vmem:[%s246 + $0xf0] sm:$0xff]
      %v303 = vld [vmem:[%s246 + $0xf8] sm:$0xff]
      %v304 = vld [vmem:[%s246 + $0x100] sm:$0x3]
      %v305 = vld [vmem:[%s246 + $0x108] sm:$0xff]
      %v306 = vld [vmem:[%s246 + $0x110] sm:$0xff]
      %v307 = vld [vmem:[%s246 + $0x118] sm:$0x3]
      %v308 = vld [vmem:[%s246 + $0x120] sm:$0xff]
      %v309 = vld [vmem:[%s246 + $0x128] sm:$0xff]
      %v310 = vld [vmem:[%s246 + $0x130] sm:$0x3]
      %v311 = vld [vmem:[%s246 + $0x138] sm:$0xff]
      %v312 = vld [vmem:[%s246 + $0x140] sm:$0xff]
      %v313 = vld [vmem:[%s246 + $0x148] sm:$0x3]
      %v314 = vld [vmem:[%s246 + $0x150] sm:$0xff]
      %v315 = vld [vmem:[%s246 + $0x158] sm:$0xff]
      %v316 = vld [vmem:[%s246 + $0x160] sm:$0x3]
      %v317 = vld [vmem:[%s246 + $0x168] sm:$0xff]
      %v318 = vld [vmem:[%s246 + $0x170] sm:$0xff]
      %v319 = vld [vmem:[%s246 + $0x178] sm:$0x3]
      %v320 = vld [vmem:[%s261] sm:$0xff]
      %v321 = vld [vmem:[%s261 + $0x8] sm:$0xff]
      %v322 = vld [vmem:[%s261 + $0x10] sm:$0x3]
      %v323 = vld [vmem:[%s261 + $0x18] sm:$0xff]
      %v324 = vld [vmem:[%s261 + $0x20] sm:$0xff]
      %v325 = vld [vmem:[%s261 + $0x28] sm:$0x3]
      %vm380 = vcmask 1046528
      %v381 = vrot.slane %v272, 1
      %v382 = vrot.slane %v273, 1
      %v383 = vsel %vm380, %v381, %v382
      %v384 = vrot.slane %v274, 1
      %v385 = vsel %vm380, %v382, %v384
      %v386 = vrot.slane %v275, 1
      %v387 = vrot.slane %v276, 1
      %v388 = vsel %vm380, %v386, %v387
      %v389 = vrot.slane %v277, 1
      %v390 = vsel %vm380, %v387, %v389
      %v391 = vrot.slane %v278, 1
      %v392 = vrot.slane %v279, 1
      %v393 = vsel %vm380, %v391, %v392
      %v394 = vrot.slane %v280, 1
      %v395 = vsel %vm380, %v392, %v394
      %v396 = vrot.slane %v281, 1
      %v397 = vrot.slane %v282, 1
      %v398 = vsel %vm380, %v396, %v397
      %v399 = vrot.slane %v283, 1
      %v400 = vsel %vm380, %v397, %v399
      %v401 = vrot.slane %v284, 1
      %v402 = vrot.slane %v285, 1
      %v403 = vsel %vm380, %v401, %v402
      %v404 = vrot.slane %v286, 1
      %v405 = vsel %vm380, %v402, %v404
      %v406 = vrot.slane %v287, 1
      %v407 = vrot.slane %v288, 1
      %v408 = vsel %vm380, %v406, %v407
      %v409 = vrot.slane %v289, 1
      %v410 = vsel %vm380, %v407, %v409
      %v411 = vrot.slane %v290, 1
      %v412 = vrot.slane %v291, 1
      %v413 = vsel %vm380, %v411, %v412
      %v414 = vrot.slane %v292, 1
      %v415 = vsel %vm380, %v412, %v414
      %v416 = vrot.slane %v293, 1
      %v417 = vrot.slane %v294, 1
      %v418 = vsel %vm380, %v416, %v417
      %v419 = vrot.slane %v295, 1
      %v420 = vsel %vm380, %v417, %v419
      %v421 = vrot.slane %v296, 1
      %v422 = vrot.slane %v297, 1
      %v423 = vsel %vm380, %v421, %v422
      %v424 = vrot.slane %v298, 1
      %v425 = vsel %vm380, %v422, %v424
      %v426 = vrot.slane %v299, 1
      %v427 = vrot.slane %v300, 1
      %v428 = vsel %vm380, %v426, %v427
      %v429 = vrot.slane %v301, 1
      %v430 = vsel %vm380, %v427, %v429
      %v431 = vrot.slane %v302, 1
      %v432 = vrot.slane %v303, 1
      %v433 = vsel %vm380, %v431, %v432
      %v434 = vrot.slane %v304, 1
      %v435 = vsel %vm380, %v432, %v434
      %v436 = vrot.slane %v305, 1
      %v437 = vrot.slane %v306, 1
      %v438 = vsel %vm380, %v436, %v437
      %v439 = vrot.slane %v307, 1
      %v440 = vsel %vm380, %v437, %v439
      %v441 = vrot.slane %v308, 1
      %v442 = vrot.slane %v309, 1
      %v443 = vsel %vm380, %v441, %v442
      %v444 = vrot.slane %v310, 1
      %v445 = vsel %vm380, %v442, %v444
      %v446 = vrot.slane %v311, 1
      %v447 = vrot.slane %v312, 1
      %v448 = vsel %vm380, %v446, %v447
      %v449 = vrot.slane %v313, 1
      %v450 = vsel %vm380, %v447, %v449
      %v451 = vrot.slane %v314, 1
      %v452 = vrot.slane %v315, 1
      %v453 = vsel %vm380, %v451, %v452
      %v454 = vrot.slane %v316, 1
      %v455 = vsel %vm380, %v452, %v454
      %v456 = vrot.slane %v317, 1
      %v457 = vrot.slane %v318, 1
      %v458 = vsel %vm380, %v456, %v457
      %v459 = vrot.slane %v319, 1
      %v460 = vsel %vm380, %v457, %v459
      %v461 = vrot.slane %v320, 1
      %v462 = vrot.slane %v321, 1
      %v463 = vsel %vm380, %v461, %v462
      %v464 = vrot.slane %v322, 1
      %v465 = vsel %vm380, %v462, %v464
      %v466 = vrot.slane %v323, 1
      %v467 = vrot.slane %v324, 1
      %v468 = vsel %vm380, %v466, %v467
      %v469 = vrot.slane %v325, 1
      %v470 = vsel %vm380, %v467, %v469
      %471 = vrot.lane.b32.xlu0 %v383, 4
      %v472 = vpop.permute.xlu0 %471
      %473 = vrot.lane.b32.xlu0 %v385, 4
      %v474 = vpop.permute.xlu0 %473
      %475 = vrot.lane.b32.xlu0 %v388, 4
      %v476 = vpop.permute.xlu0 %475
      %477 = vrot.lane.b32.xlu0 %v390, 4
      %v478 = vpop.permute.xlu0 %477
      %479 = vrot.lane.b32.xlu0 %v393, 4
      %v480 = vpop.permute.xlu0 %479
      %481 = vrot.lane.b32.xlu0 %v395, 4
      %v482 = vpop.permute.xlu0 %481
      %483 = vrot.lane.b32.xlu0 %v398, 4
      %v484 = vpop.permute.xlu0 %483
      %485 = vrot.lane.b32.xlu0 %v400, 4
      %v486 = vpop.permute.xlu0 %485
      %487 = vrot.lane.b32.xlu0 %v403, 4
      %v488 = vpop.permute.xlu0 %487
      %489 = vrot.lane.b32.xlu0 %v405, 4
      %v490 = vpop.permute.xlu0 %489
      %491 = vrot.lane.b32.xlu0 %v408, 4
      %v492 = vpop.permute.xlu0 %491
      %493 = vrot.lane.b32.xlu0 %v410, 4
      %v494 = vpop.permute.xlu0 %493
      %495 = vrot.lane.b32.xlu0 %v413, 4
      %v496 = vpop.permute.xlu0 %495
      %497 = vrot.lane.b32.xlu0 %v415, 4
      %v498 = vpop.permute.xlu0 %497
      %499 = vrot.lane.b32.xlu0 %v418, 4
      %v500 = vpop.permute.xlu0 %499
      %501 = vrot.lane.b32.xlu0 %v420, 4
      %v502 = vpop.permute.xlu0 %501
      %503 = vrot.lane.b32.xlu0 %v423, 4
      %v504 = vpop.permute.xlu0 %503
      %505 = vrot.lane.b32.xlu0 %v425, 4
      %v506 = vpop.permute.xlu0 %505
      %507 = vrot.lane.b32.xlu0 %v428, 4
      %v508 = vpop.permute.xlu0 %507
      %509 = vrot.lane.b32.xlu0 %v430, 4
      %v510 = vpop.permute.xlu0 %509
      %511 = vrot.lane.b32.xlu0 %v433, 4
      %v512 = vpop.permute.xlu0 %511
      %513 = vrot.lane.b32.xlu0 %v435, 4
      %v514 = vpop.permute.xlu0 %513
      %515 = vrot.lane.b32.xlu0 %v438, 4
      %v516 = vpop.permute.xlu0 %515
      %517 = vrot.lane.b32.xlu0 %v440, 4
      %v518 = vpop.permute.xlu0 %517
      %519 = vrot.lane.b32.xlu0 %v443, 4
      %v520 = vpop.permute.xlu0 %519
      %521 = vrot.lane.b32.xlu0 %v445, 4
      %v522 = vpop.permute.xlu0 %521
      %523 = vrot.lane.b32.xlu0 %v448, 4
      %v524 = vpop.permute.xlu0 %523
      %525 = vrot.lane.b32.xlu0 %v450, 4
      %v526 = vpop.permute.xlu0 %525
      %527 = vrot.lane.b32.xlu0 %v453, 4
      %v528 = vpop.permute.xlu0 %527
      %529 = vrot.lane.b32.xlu0 %v455, 4
      %v530 = vpop.permute.xlu0 %529
      %531 = vrot.lane.b32.xlu0 %v458, 4
      %v532 = vpop.permute.xlu0 %531
      %533 = vrot.lane.b32.xlu0 %v460, 4
      %v534 = vpop.permute.xlu0 %533
      %535 = vrot.lane.b32.xlu0 %v463, 4
      %v536 = vpop.permute.xlu0 %535
      %537 = vrot.lane.b32.xlu0 %v465, 4
      %v538 = vpop.permute.xlu0 %537
      %539 = vrot.lane.b32.xlu0 %v468, 4
      %v540 = vpop.permute.xlu0 %539
      %541 = vrot.lane.b32.xlu0 %v470, 4
      %v542 = vpop.permute.xlu0 %541
      %vm579 = vcmask 1045504
      %v580 = vrot.slane %v272, 2
      %v581 = vrot.slane %v273, 2
      %v582 = vsel %vm579, %v580, %v581
      %v583 = vrot.slane %v274, 2
      %v584 = vsel %vm579, %v581, %v583
      %v585 = vrot.slane %v275, 2
      %v586 = vrot.slane %v276, 2
      %v587 = vsel %vm579, %v585, %v586
      %v588 = vrot.slane %v277, 2
      %v589 = vsel %vm579, %v586, %v588
      %v590 = vrot.slane %v278, 2
      %v591 = vrot.slane %v279, 2
      %v592 = vsel %vm579, %v590, %v591
      %v593 = vrot.slane %v280, 2
      %v594 = vsel %vm579, %v591, %v593
      %v595 = vrot.slane %v281, 2
      %v596 = vrot.slane %v282, 2
      %v597 = vsel %vm579, %v595, %v596
      %v598 = vrot.slane %v283, 2
      %v599 = vsel %vm579, %v596, %v598
      %v600 = vrot.slane %v284, 2
      %v601 = vrot.slane %v285, 2
      %v602 = vsel %vm579, %v600, %v601
      %v603 = vrot.slane %v286, 2
      %v604 = vsel %vm579, %v601, %v603
      %v605 = vrot.slane %v287, 2
      %v606 = vrot.slane %v288, 2
      %v607 = vsel %vm579, %v605, %v606
      %v608 = vrot.slane %v289, 2
      %v609 = vsel %vm579, %v606, %v608
      %v610 = vrot.slane %v290, 2
      %v611 = vrot.slane %v291, 2
      %v612 = vsel %vm579, %v610, %v611
      %v613 = vrot.slane %v292, 2
      %v614 = vsel %vm579, %v611, %v613
      %v615 = vrot.slane %v293, 2
      %v616 = vrot.slane %v294, 2
      %v617 = vsel %vm579, %v615, %v616
      %v618 = vrot.slane %v295, 2
      %v619 = vsel %vm579, %v616, %v618
      %v620 = vrot.slane %v296, 2
      %v621 = vrot.slane %v297, 2
      %v622 = vsel %vm579, %v620, %v621
      %v623 = vrot.slane %v298, 2
      %v624 = vsel %vm579, %v621, %v623
      %v625 = vrot.slane %v299, 2
      %v626 = vrot.slane %v300, 2
      %v627 = vsel %vm579, %v625, %v626
      %v628 = vrot.slane %v301, 2
      %v629 = vsel %vm579, %v626, %v628
      %v630 = vrot.slane %v302, 2
      %v631 = vrot.slane %v303, 2
      %v632 = vsel %vm579, %v630, %v631
      %v633 = vrot.slane %v304, 2
      %v634 = vsel %vm579, %v631, %v633
      %v635 = vrot.slane %v305, 2
      %v636 = vrot.slane %v306, 2
      %v637 = vsel %vm579, %v635, %v636
      %v638 = vrot.slane %v307, 2
      %v639 = vsel %vm579, %v636, %v638
      %v640 = vrot.slane %v308, 2
      %v641 = vrot.slane %v309, 2
      %v642 = vsel %vm579, %v640, %v641
      %v643 = vrot.slane %v310, 2
      %v644 = vsel %vm579, %v641, %v643
      %v645 = vrot.slane %v311, 2
      %v646 = vrot.slane %v312, 2
      %v647 = vsel %vm579, %v645, %v646
      %v648 = vrot.slane %v313, 2
      %v649 = vsel %vm579, %v646, %v648
      %v650 = vrot.slane %v314, 2
      %v651 = vrot.slane %v315, 2
      %v652 = vsel %vm579, %v650, %v651
      %v653 = vrot.slane %v316, 2
      %v654 = vsel %vm579, %v651, %v653
      %v655 = vrot.slane %v317, 2
      %v656 = vrot.slane %v318, 2
      %v657 = vsel %vm579, %v655, %v656
      %v658 = vrot.slane %v319, 2
      %v659 = vsel %vm579, %v656, %v658
      %v660 = vrot.slane %v320, 2
      %v661 = vrot.slane %v321, 2
      %v662 = vsel %vm579, %v660, %v661
      %v663 = vrot.slane %v322, 2
      %v664 = vsel %vm579, %v661, %v663
      %v665 = vrot.slane %v323, 2
      %v666 = vrot.slane %v324, 2
      %v667 = vsel %vm579, %v665, %v666
      %v668 = vrot.slane %v325, 2
      %v669 = vsel %vm579, %v666, %v668
      %670 = vrot.lane.b32.xlu0 %v582, 8
      %v671 = vpop.permute.xlu0 %670
      %672 = vrot.lane.b32.xlu0 %v584, 8
      %v673 = vpop.permute.xlu0 %672
      %674 = vrot.lane.b32.xlu0 %v587, 8
      %v675 = vpop.permute.xlu0 %674
      %676 = vrot.lane.b32.xlu0 %v589, 8
      %v677 = vpop.permute.xlu0 %676
      %678 = vrot.lane.b32.xlu0 %v592, 8
      %v679 = vpop.permute.xlu0 %678
      %680 = vrot.lane.b32.xlu0 %v594, 8
      %v681 = vpop.permute.xlu0 %680
      %682 = vrot.lane.b32.xlu0 %v597, 8
      %v683 = vpop.permute.xlu0 %682
      %684 = vrot.lane.b32.xlu0 %v599, 8
      %v685 = vpop.permute.xlu0 %684
      %686 = vrot.lane.b32.xlu0 %v602, 8
      %v687 = vpop.permute.xlu0 %686
      %688 = vrot.lane.b32.xlu0 %v604, 8
      %v689 = vpop.permute.xlu0 %688
      %690 = vrot.lane.b32.xlu0 %v607, 8
      %v691 = vpop.permute.xlu0 %690
      %692 = vrot.lane.b32.xlu0 %v609, 8
      %v693 = vpop.permute.xlu0 %692
      %694 = vrot.lane.b32.xlu0 %v612, 8
      %v695 = vpop.permute.xlu0 %694
      %696 = vrot.lane.b32.xlu0 %v614, 8
      %v697 = vpop.permute.xlu0 %696
      %698 = vrot.lane.b32.xlu0 %v617, 8
      %v699 = vpop.permute.xlu0 %698
      %700 = vrot.lane.b32.xlu0 %v619, 8
      %v701 = vpop.permute.xlu0 %700
      %702 = vrot.lane.b32.xlu0 %v622, 8
      %v703 = vpop.permute.xlu0 %702
      %704 = vrot.lane.b32.xlu0 %v624, 8
      %v705 = vpop.permute.xlu0 %704
      %706 = vrot.lane.b32.xlu0 %v627, 8
      %v707 = vpop.permute.xlu0 %706
      %708 = vrot.lane.b32.xlu0 %v629, 8
      %v709 = vpop.permute.xlu0 %708
      %710 = vrot.lane.b32.xlu0 %v632, 8
      %v711 = vpop.permute.xlu0 %710
      %712 = vrot.lane.b32.xlu0 %v634, 8
      %v713 = vpop.permute.xlu0 %712
      %714 = vrot.lane.b32.xlu0 %v637, 8
      %v715 = vpop.permute.xlu0 %714
      %716 = vrot.lane.b32.xlu0 %v639, 8
      %v717 = vpop.permute.xlu0 %716
      %718 = vrot.lane.b32.xlu0 %v642, 8
      %v719 = vpop.permute.xlu0 %718
      %720 = vrot.lane.b32.xlu0 %v644, 8
      %v721 = vpop.permute.xlu0 %720
      %722 = vrot.lane.b32.xlu0 %v647, 8
      %v723 = vpop.permute.xlu0 %722
      %724 = vrot.lane.b32.xlu0 %v649, 8
      %v725 = vpop.permute.xlu0 %724
      %726 = vrot.lane.b32.xlu0 %v652, 8
      %v727 = vpop.permute.xlu0 %726
      %728 = vrot.lane.b32.xlu0 %v654, 8
      %v729 = vpop.permute.xlu0 %728
      %730 = vrot.lane.b32.xlu0 %v657, 8
      %v731 = vpop.permute.xlu0 %730
      %732 = vrot.lane.b32.xlu0 %v659, 8
      %v733 = vpop.permute.xlu0 %732
      %734 = vrot.lane.b32.xlu0 %v662, 8
      %v735 = vpop.permute.xlu0 %734
      %736 = vrot.lane.b32.xlu0 %v664, 8
      %v737 = vpop.permute.xlu0 %736
      %738 = vrot.lane.b32.xlu0 %v667, 8
      %v739 = vpop.permute.xlu0 %738
      %740 = vrot.lane.b32.xlu0 %v669, 8
      %v741 = vpop.permute.xlu0 %740
      %vm778 = vcmask 31744
      %v779 = vsel %vm778, %v272, %v472
      %v780 = vsel %vm778, %v273, %v474
      %v781 = vsel %vm778, %v275, %v476
      %v782 = vsel %vm778, %v276, %v478
      %v783 = vsel %vm778, %v278, %v480
      %v784 = vsel %vm778, %v279, %v482
      %v785 = vsel %vm778, %v281, %v484
      %v786 = vsel %vm778, %v282, %v486
      %v787 = vsel %vm778, %v284, %v488
      %v788 = vsel %vm778, %v285, %v490
      %v789 = vsel %vm778, %v287, %v492
      %v790 = vsel %vm778, %v288, %v494
      %v791 = vsel %vm778, %v290, %v496
      %v792 = vsel %vm778, %v291, %v498
      %v793 = vsel %vm778, %v293, %v500
      %v794 = vsel %vm778, %v294, %v502
      %v795 = vsel %vm778, %v296, %v504
      %v796 = vsel %vm778, %v297, %v506
      %v797 = vsel %vm778, %v299, %v508
      %v798 = vsel %vm778, %v300, %v510
      %v799 = vsel %vm778, %v302, %v512
      %v800 = vsel %vm778, %v303, %v514
      %v801 = vsel %vm778, %v305, %v516
      %v802 = vsel %vm778, %v306, %v518
      %v803 = vsel %vm778, %v308, %v520
      %v804 = vsel %vm778, %v309, %v522
      %v805 = vsel %vm778, %v311, %v524
      %v806 = vsel %vm778, %v312, %v526
      %v807 = vsel %vm778, %v314, %v528
      %v808 = vsel %vm778, %v315, %v530
      %v809 = vsel %vm778, %v317, %v532
      %v810 = vsel %vm778, %v318, %v534
      %v811 = vsel %vm778, %v320, %v536
      %v812 = vsel %vm778, %v321, %v538
      %v813 = vsel %vm778, %v323, %v540
      %v814 = vsel %vm778, %v324, %v542
      %vm815 = vcmask 64512
      %v816 = vsel %vm815, %v779, %v671
      %v817 = vsel %vm815, %v780, %v673
      %v818 = vsel %vm815, %v781, %v675
      %v819 = vsel %vm815, %v782, %v677
      %v820 = vsel %vm815, %v783, %v679
      %v821 = vsel %vm815, %v784, %v681
      %v822 = vsel %vm815, %v785, %v683
      %v823 = vsel %vm815, %v786, %v685
      %v824 = vsel %vm815, %v787, %v687
      %v825 = vsel %vm815, %v788, %v689
      %v826 = vsel %vm815, %v789, %v691
      %v827 = vsel %vm815, %v790, %v693
      %v828 = vsel %vm815, %v791, %v695
      %v829 = vsel %vm815, %v792, %v697
      %v830 = vsel %vm815, %v793, %v699
      %v831 = vsel %vm815, %v794, %v701
      %v832 = vsel %vm815, %v795, %v703
      %v833 = vsel %vm815, %v796, %v705
      %v834 = vsel %vm815, %v797, %v707
      %v835 = vsel %vm815, %v798, %v709
      %v836 = vsel %vm815, %v799, %v711
      %v837 = vsel %vm815, %v800, %v713
      %v838 = vsel %vm815, %v801, %v715
      %v839 = vsel %vm815, %v802, %v717
      %v840 = vsel %vm815, %v803, %v719
      %v841 = vsel %vm815, %v804, %v721
      %v842 = vsel %vm815, %v805, %v723
      %v843 = vsel %vm815, %v806, %v725
      %v844 = vsel %vm815, %v807, %v727
      %v845 = vsel %vm815, %v808, %v729
      %v846 = vsel %vm815, %v809, %v731
      %v847 = vsel %vm815, %v810, %v733
      %v848 = vsel %vm815, %v811, %v735
      %v849 = vsel %vm815, %v812, %v737
      %v850 = vsel %vm815, %v813, %v739
      %v851 = vsel %vm815, %v814, %v741
      %v852 = vld [vmem:[%s2] sm:$0xff]
      %v853 = vld [vmem:[%s2 + $0x8] sm:$0xf]
      %vm854 = vcmask 97280
      %v856 = vsel %vm854, %v816, 0
      %v859 = vsel %vm854, %v817, 0
      %v862 = vsel %vm854, %v818, 0
      %v865 = vsel %vm854, %v819, 0
      %v868 = vsel %vm854, %v820, 0
      %v871 = vsel %vm854, %v821, 0
      %v874 = vsel %vm854, %v822, 0
      %v877 = vsel %vm854, %v823, 0
      %v880 = vsel %vm854, %v824, 0
      %v883 = vsel %vm854, %v825, 0
      %v886 = vsel %vm854, %v826, 0
      %v889 = vsel %vm854, %v827, 0
      %v892 = vsel %vm854, %v828, 0
      %v895 = vsel %vm854, %v829, 0
      %v898 = vsel %vm854, %v830, 0
      %v901 = vsel %vm854, %v831, 0
      %v904 = vsel %vm854, %v832, 0
      %v907 = vsel %vm854, %v833, 0
      %v910 = vsel %vm854, %v834, 0
      %v913 = vsel %vm854, %v835, 0
      %v916 = vsel %vm854, %v836, 0
      %v919 = vsel %vm854, %v837, 0
      %v922 = vsel %vm854, %v838, 0
      %v925 = vsel %vm854, %v839, 0
      %v928 = vsel %vm854, %v840, 0
      %v931 = vsel %vm854, %v841, 0
      %v934 = vsel %vm854, %v842, 0
      %v937 = vsel %vm854, %v843, 0
      %v940 = vsel %vm854, %v844, 0
      %v943 = vsel %vm854, %v845, 0
      %v946 = vsel %vm854, %v846, 0
      %v949 = vsel %vm854, %v847, 0
      %vm951 = vcmask 1043456
      %v953 = vsel %vm951, %v853, 0
      %955 = vmatprep.subr.mxu0 0.0
      %956 = vmatpush1.msra.mxu0 %v852
      %957 = vmatprep.subr.mxu0 0.0
      %958 = vmatpush1.msra.mxu0 %v953
      %959 = vmatprep.subr.mxu0 0.0
      %960 = vmatpush1.msra.mxu0 0.0
      %961 = vmatprep.subr.mxu0 0.0
      %962 = vmatpush1.msra.mxu0 0.0
      %963 = vmatprep.subr.mxu0 0.0
      %964 = vmatpush1.msra.mxu0 0.0
      %965 = vmatprep.subr.mxu0 0.0
      %966 = vmatpush1.msra.mxu0 0.0
      %967 = vmatprep.subr.mxu0 0.0
      %968 = vmatpush1.msra.mxu0 0.0
      %969 = vmatprep.subr.mxu0 0.0
      %970 = vmatpush1.msra.mxu0 0.0
      %971 = vmatprep.subr.mxu0 0.0
      %972 = vmatpush1.msra.mxu0 0.0
      %973 = vmatprep.subr.mxu0 0.0
      %974 = vmatpush1.msra.mxu0 0.0
      %975 = vmatprep.subr.mxu0 0.0
      %976 = vmatpush1.msra.mxu0 0.0
      %977 = vmatprep.subr.mxu0 0.0
      %978 = vmatpush1.msra.mxu0 0.0
      %979 = vmatprep.subr.mxu0 0.0
      %980 = vmatpush1.msra.mxu0 0.0
      %981 = vmatprep.subr.mxu0 0.0
      %982 = vmatpush1.msra.mxu0 0.0
      %983 = vmatprep.subr.mxu0 0.0
      %984 = vmatpush1.msra.mxu0 0.0
      %985 = vmatprep.subr.mxu0 0.0
      %986 = vmatpush1.msra.mxu0 0.0
      %987 = vmatprep.subr.mxu0 0.0
      %988 = vmatpush1.msra.mxu0 0.0
      %989 = vmatprep.subr.mxu0 0.0
      %990 = vmatpush1.msra.mxu0 0.0
      %991 = vmatprep.subr.mxu0 0.0
      %992 = vmatpush1.msra.mxu0 0.0
      %993 = vmatprep.subr.mxu0 0.0
      %994 = vmatpush1.msra.mxu0 0.0
      %995 = vmatprep.subr.mxu0 0.0
      %996 = vmatpush1.msra.mxu0 0.0
      %997 = vmatprep.subr.mxu0 0.0
      %998 = vmatpush1.msra.mxu0 0.0
      %999 = vmatprep.subr.mxu0 0.0
      %1000 = vmatpush1.msra.mxu0 0.0
      %1001 = vmatprep.subr.mxu0 0.0
      %1002 = vmatpush1.msra.mxu0 0.0
      %1003 = vmatprep.subr.mxu0 0.0
      %1004 = vmatpush1.msra.mxu0 0.0
      %1005 = vmatprep.subr.mxu0 0.0
      %1006 = vmatpush1.msra.mxu0 0.0
      %1007 = vmatprep.subr.mxu0 0.0
      %1008 = vmatpush1.msra.mxu0 0.0
      %1009 = vmatprep.subr.mxu0 0.0
      %1010 = vmatpush1.msra.mxu0 0.0
      %1011 = vmatprep.subr.mxu0 0.0
      %1012 = vmatpush1.msra.mxu0 0.0
      %1013 = vmatprep.subr.mxu0 0.0
      %1014 = vmatpush1.msra.mxu0 0.0
      %1015 = vmatprep.subr.mxu0 0.0
      %1016 = vmatpush1.msra.mxu0 0.0
      %1017 = vmatprep.subr.mxu0 0.0
      %1018 = vmatpush1.msra.mxu0 0.0
      %1019 = vmatprep.mubr.f32.mxu0 0.0
      %1020 = vmatmul.mubr.f32.gmra.mrb[0].mxu0 %v856
      %v1021 = vpop.f32.mrb[0].mxu0
      %v1022 = vadd.f32 0.0, %v1021
      %v1023 = vpop.f32.mrb[0].mxu0
      %1024 = vmatprep.mubr.f32.mxu0 0.0
      %1025 = vmatmul.mubr.f32.gmra.mrb[0].mxu0 %v859
      %v1026 = vpop.f32.mrb[0].mxu0
      %v1027 = vadd.f32 0.0, %v1026
      %v1028 = vpop.f32.mrb[0].mxu0
      %1029 = vmatprep.mubr.f32.mxu0 0.0
      %1030 = vmatmul.mubr.f32.gmra.mrb[0].mxu0 %v862
      %v1031 = vpop.f32.mrb[0].mxu0
      %v1032 = vadd.f32 0.0, %v1031
      %v1033 = vpop.f32.mrb[0].mxu0
      %1034 = vmatprep.mubr.f32.mxu0 0.0
      %1035 = vmatmul.mubr.f32.gmra.mrb[0].mxu0 %v865
      %v1036 = vpop.f32.mrb[0].mxu0
      %v1037 = vadd.f32 0.0, %v1036
      %v1038 = vpop.f32.mrb[0].mxu0
      %1039 = vmatprep.mubr.f32.mxu0 0.0
      %1040 = vmatmul.mubr.f32.gmra.mrb[0].mxu0 %v868
      %v1041 = vpop.f32.mrb[0].mxu0
      %v1042 = vadd.f32 0.0, %v1041
      %v1043 = vpop.f32.mrb[0].mxu0
      %1044 = vmatprep.mubr.f32.mxu0 0.0
      %1045 = vmatmul.mubr.f32.gmra.mrb[0].mxu0 %v871
      %v1046 = vpop.f32.mrb[0].mxu0
      %v1047 = vadd.f32 0.0, %v1046
      %v1048 = vpop.f32.mrb[0].mxu0
      %1049 = vmatprep.mubr.f32.mxu0 0.0
      %1050 = vmatmul.mubr.f32.gmra.mrb[0].mxu0 %v874
      %v1051 = vpop.f32.mrb[0].mxu0
      %v1052 = vadd.f32 0.0, %v1051
      %v1053 = vpop.f32.mrb[0].mxu0
      %1054 = vmatprep.mubr.f32.mxu0 0.0
      %1055 = vmatmul.mubr.f32.gmra.mrb[0].mxu0 %v877
      %v1056 = vpop.f32.mrb[0].mxu0
      %v1057 = vadd.f32 0.0, %v1056
      %v1058 = vpop.f32.mrb[0].mxu0
      %1059 = vmatprep.mubr.f32.mxu0 0.0
      %1060 = vmatmul.mubr.f32.gmra.mrb[0].mxu0 %v880
      %v1061 = vpop.f32.mrb[0].mxu0
      %v1062 = vadd.f32 0.0, %v1061
      %v1063 = vpop.f32.mrb[0].mxu0
      %1064 = vmatprep.mubr.f32.mxu0 0.0
      %1065 = vmatmul.mubr.f32.gmra.mrb[0].mxu0 %v883
      %v1066 = vpop.f32.mrb[0].mxu0
      %v1067 = vadd.f32 0.0, %v1066
      %v1068 = vpop.f32.mrb[0].mxu0
      %1069 = vmatprep.mubr.f32.mxu0 0.0
      %1070 = vmatmul.mubr.f32.gmra.mrb[0].mxu0 %v886
      %v1071 = vpop.f32.mrb[0].mxu0
      %v1072 = vadd.f32 0.0, %v1071
      %v1073 = vpop.f32.mrb[0].mxu0
      %1074 = vmatprep.mubr.f32.mxu0 0.0
      %1075 = vmatmul.mubr.f32.gmra.mrb[0].mxu0 %v889
      %v1076 = vpop.f32.mrb[0].mxu0
      %v1077 = vadd.f32 0.0, %v1076
      %v1078 = vpop.f32.mrb[0].mxu0
      %1079 = vmatprep.mubr.f32.mxu0 0.0
      %1080 = vmatmul.mubr.f32.gmra.mrb[0].mxu0 %v892
      %v1081 = vpop.f32.mrb[0].mxu0
      %v1082 = vadd.f32 0.0, %v1081
      %v1083 = vpop.f32.mrb[0].mxu0
      %1084 = vmatprep.mubr.f32.mxu0 0.0
      %1085 = vmatmul.mubr.f32.gmra.mrb[0].mxu0 %v895
      %v1086 = vpop.f32.mrb[0].mxu0
      %v1087 = vadd.f32 0.0, %v1086
      %v1088 = vpop.f32.mrb[0].mxu0
      %1089 = vmatprep.mubr.f32.mxu0 0.0
      %1090 = vmatmul.mubr.f32.gmra.mrb[0].mxu0 %v898
      %v1091 = vpop.f32.mrb[0].mxu0
      %v1092 = vadd.f32 0.0, %v1091
      %v1093 = vpop.f32.mrb[0].mxu0
      %1094 = vmatprep.mubr.f32.mxu0 0.0
      %1095 = vmatmul.mubr.f32.gmra.mrb[0].mxu0 %v901
      %v1096 = vpop.f32.mrb[0].mxu0
      %v1097 = vadd.f32 0.0, %v1096
      %v1098 = vpop.f32.mrb[0].mxu0
      %1099 = vmatprep.mubr.f32.mxu0 0.0
      %1100 = vmatmul.mubr.f32.gmra.mrb[0].mxu0 %v904
      %v1101 = vpop.f32.mrb[0].mxu0
      %v1102 = vadd.f32 0.0, %v1101
      %v1103 = vpop.f32.mrb[0].mxu0
      %1104 = vmatprep.mubr.f32.mxu0 0.0
      %1105 = vmatmul.mubr.f32.gmra.mrb[0].mxu0 %v907
      %v1106 = vpop.f32.mrb[0].mxu0
      %v1107 = vadd.f32 0.0, %v1106
      %v1108 = vpop.f32.mrb[0].mxu0
      %1109 = vmatprep.mubr.f32.mxu0 0.0
      %1110 = vmatmul.mubr.f32.gmra.mrb[0].mxu0 %v910
      %v1111 = vpop.f32.mrb[0].mxu0
      %v1112 = vadd.f32 0.0, %v1111
      %v1113 = vpop.f32.mrb[0].mxu0
      %1114 = vmatprep.mubr.f32.mxu0 0.0
      %1115 = vmatmul.mubr.f32.gmra.mrb[0].mxu0 %v913
      %v1116 = vpop.f32.mrb[0].mxu0
      %v1117 = vadd.f32 0.0, %v1116
      %v1118 = vpop.f32.mrb[0].mxu0
      %1119 = vmatprep.mubr.f32.mxu0 0.0
      %1120 = vmatmul.mubr.f32.gmra.mrb[0].mxu0 %v916
      %v1121 = vpop.f32.mrb[0].mxu0
      %v1122 = vadd.f32 0.0, %v1121
      %v1123 = vpop.f32.mrb[0].mxu0
      %1124 = vmatprep.mubr.f32.mxu0 0.0
      %1125 = vmatmul.mubr.f32.gmra.mrb[0].mxu0 %v919
      %v1126 = vpop.f32.mrb[0].mxu0
      %v1127 = vadd.f32 0.0, %v1126
      %v1128 = vpop.f32.mrb[0].mxu0
      %1129 = vmatprep.mubr.f32.mxu0 0.0
      %1130 = vmatmul.mubr.f32.gmra.mrb[0].mxu0 %v922
      %v1131 = vpop.f32.mrb[0].mxu0
      %v1132 = vadd.f32 0.0, %v1131
      %v1133 = vpop.f32.mrb[0].mxu0
      %1134 = vmatprep.mubr.f32.mxu0 0.0
      %1135 = vmatmul.mubr.f32.gmra.mrb[0].mxu0 %v925
      %v1136 = vpop.f32.mrb[0].mxu0
      %v1137 = vadd.f32 0.0, %v1136
      %v1138 = vpop.f32.mrb[0].mxu0
      %1139 = vmatprep.mubr.f32.mxu0 0.0
      %1140 = vmatmul.mubr.f32.gmra.mrb[0].mxu0 %v928
      %v1141 = vpop.f32.mrb[0].mxu0
      %v1142 = vadd.f32 0.0, %v1141
      %v1143 = vpop.f32.mrb[0].mxu0
      %1144 = vmatprep.mubr.f32.mxu0 0.0
      %1145 = vmatmul.mubr.f32.gmra.mrb[0].mxu0 %v931
      %v1146 = vpop.f32.mrb[0].mxu0
      %v1147 = vadd.f32 0.0, %v1146
      %v1148 = vpop.f32.mrb[0].mxu0
      %1149 = vmatprep.mubr.f32.mxu0 0.0
      %1150 = vmatmul.mubr.f32.gmra.mrb[0].mxu0 %v934
      %v1151 = vpop.f32.mrb[0].mxu0
      %v1152 = vadd.f32 0.0, %v1151
      %v1153 = vpop.f32.mrb[0].mxu0
      %1154 = vmatprep.mubr.f32.mxu0 0.0
      %1155 = vmatmul.mubr.f32.gmra.mrb[0].mxu0 %v937
      %v1156 = vpop.f32.mrb[0].mxu0
      %v1157 = vadd.f32 0.0, %v1156
      %v1158 = vpop.f32.mrb[0].mxu0
      %1159 = vmatprep.mubr.f32.mxu0 0.0
      %1160 = vmatmul.mubr.f32.gmra.mrb[0].mxu0 %v940
      %v1161 = vpop.f32.mrb[0].mxu0
      %v1162 = vadd.f32 0.0, %v1161
      %v1163 = vpop.f32.mrb[0].mxu0
      %1164 = vmatprep.mubr.f32.mxu0 0.0
      %1165 = vmatmul.mubr.f32.gmra.mrb[0].mxu0 %v943
      %v1166 = vpop.f32.mrb[0].mxu0
      %v1167 = vadd.f32 0.0, %v1166
      %v1168 = vpop.f32.mrb[0].mxu0
      %1169 = vmatprep.mubr.f32.mxu0 0.0
      %1170 = vmatmul.mubr.f32.gmra.mrb[0].mxu0 %v946
      %v1171 = vpop.f32.mrb[0].mxu0
      %v1172 = vadd.f32 0.0, %v1171
      %v1173 = vpop.f32.mrb[0].mxu0
      %1174 = vmatprep.mubr.f32.mxu0 0.0
      %1175 = vmatmul.mubr.f32.gmra.mrb[0].mxu0 %v949
      %v1176 = vpop.f32.mrb[0].mxu0
      %v1177 = vadd.f32 0.0, %v1176
      %v1178 = vpop.f32.mrb[0].mxu0
      %1179 = vdwg.mxu0
      %1180 = vst.msk [vmem:[#allocation2] sm:$0xff] %vm815, %v1022
      %1181 = vst.msk [vmem:[#allocation2 + $0x8] sm:$0xff] %vm815, %v1027
      %1182 = vst.msk [vmem:[#allocation2 + $0x10] sm:$0xff] %vm815, %v1032
      %1183 = vst.msk [vmem:[#allocation2 + $0x18] sm:$0xff] %vm815, %v1037
      %1184 = vst.msk [vmem:[#allocation2 + $0x20] sm:$0xff] %vm815, %v1042
      %1185 = vst.msk [vmem:[#allocation2 + $0x28] sm:$0xff] %vm815, %v1047
      %1186 = vst.msk [vmem:[#allocation2 + $0x30] sm:$0xff] %vm815, %v1052
      %1187 = vst.msk [vmem:[#allocation2 + $0x38] sm:$0xff] %vm815, %v1057
      %1188 = vst.msk [vmem:[#allocation2 + $0x40] sm:$0xff] %vm815, %v1062
      %1189 = vst.msk [vmem:[#allocation2 + $0x48] sm:$0xff] %vm815, %v1067
      %1190 = vst.msk [vmem:[#allocation2 + $0x50] sm:$0xff] %vm815, %v1072
      %1191 = vst.msk [vmem:[#allocation2 + $0x58] sm:$0xff] %vm815, %v1077
      %1192 = vst.msk [vmem:[#allocation2 + $0x60] sm:$0xff] %vm815, %v1082
      %1193 = vst.msk [vmem:[#allocation2 + $0x68] sm:$0xff] %vm815, %v1087
      %1194 = vst.msk [vmem:[#allocation2 + $0x70] sm:$0xff] %vm815, %v1092
      %1195 = vst.msk [vmem:[#allocation2 + $0x78] sm:$0xff] %vm815, %v1097
      %1196 = vst.msk [vmem:[#allocation2 + $0x80] sm:$0xff] %vm815, %v1102
      %1197 = vst.msk [vmem:[#allocation2 + $0x88] sm:$0xff] %vm815, %v1107
      %1198 = vst.msk [vmem:[#allocation2 + $0x90] sm:$0xff] %vm815, %v1112
      %1199 = vst.msk [vmem:[#allocation2 + $0x98] sm:$0xff] %vm815, %v1117
      %1200 = vst.msk [vmem:[#allocation2 + $0xa0] sm:$0xff] %vm815, %v1122
      %1201 = vst.msk [vmem:[#allocation2 + $0xa8] sm:$0xff] %vm815, %v1127
      %1202 = vst.msk [vmem:[#allocation2 + $0xb0] sm:$0xff] %vm815, %v1132
      %1203 = vst.msk [vmem:[#allocation2 + $0xb8] sm:$0xff] %vm815, %v1137
      %1204 = vst.msk [vmem:[#allocation2 + $0xc0] sm:$0xff] %vm815, %v1142
      %1205 = vst.msk [vmem:[#allocation2 + $0xc8] sm:$0xff] %vm815, %v1147
      %1206 = vst.msk [vmem:[#allocation2 + $0xd0] sm:$0xff] %vm815, %v1152
      %1207 = vst.msk [vmem:[#allocation2 + $0xd8] sm:$0xff] %vm815, %v1157
      %1208 = vst.msk [vmem:[#allocation2 + $0xe0] sm:$0xff] %vm815, %v1162
      %1209 = vst.msk [vmem:[#allocation2 + $0xe8] sm:$0xff] %vm815, %v1167
      %1210 = vst.msk [vmem:[#allocation2 + $0xf0] sm:$0xff] %vm815, %v1172
      %1211 = vst.msk [vmem:[#allocation2 + $0xf8] sm:$0xff] %vm815, %v1177
      %s1212 = scalar_lea.vmem %s2, 16
      %v1213 = vld [vmem:[%s1212] sm:$0xff]
      %v1214 = vld [vmem:[%s1212 + $0x8] sm:$0xf]
      %v1216 = vsel %vm854, %v848, 0
      %v1219 = vsel %vm854, %v849, 0
      %v1222 = vsel %vm951, %v1214, 0
      %1224 = vmatprep.subr.mxu0 0.0
      %1225 = vmatpush1.msra.mxu0 %v1213
      %1226 = vmatprep.subr.mxu0 0.0
      %1227 = vmatpush1.msra.mxu0 %v1222
      %1228 = vmatprep.subr.mxu0 0.0
      %1229 = vmatpush1.msra.mxu0 0.0
      %1230 = vmatprep.subr.mxu0 0.0
      %1231 = vmatpush1.msra.mxu0 0.0
      %1232 = vmatprep.subr.mxu0 0.0
      %1233 = vmatpush1.msra.mxu0 0.0
      %1234 = vmatprep.subr.mxu0 0.0
      %1235 = vmatpush1.msra.mxu0 0.0
      %1236 = vmatprep.subr.mxu0 0.0
      %1237 = vmatpush1.msra.mxu0 0.0
      %1238 = vmatprep.subr.mxu0 0.0
      %1239 = vmatpush1.msra.mxu0 0.0
      %1240 = vmatprep.subr.mxu0 0.0
      %1241 = vmatpush1.msra.mxu0 0.0
      %1242 = vmatprep.subr.mxu0 0.0
      %1243 = vmatpush1.msra.mxu0 0.0
      %1244 = vmatprep.subr.mxu0 0.0
      %1245 = vmatpush1.msra.mxu0 0.0
      %1246 = vmatprep.subr.mxu0 0.0
      %1247 = vmatpush1.msra.mxu0 0.0
      %1248 = vmatprep.subr.mxu0 0.0
      %1249 = vmatpush1.msra.mxu0 0.0
      %1250 = vmatprep.subr.mxu0 0.0
      %1251 = vmatpush1.msra.mxu0 0.0
      %1252 = vmatprep.subr.mxu0 0.0
      %1253 = vmatpush1.msra.mxu0 0.0
      %1254 = vmatprep.subr.mxu0 0.0
      %1255 = vmatpush1.msra.mxu0 0.0
      %1256 = vmatprep.subr.mxu0 0.0
      %1257 = vmatpush1.msra.mxu0 0.0
      %1258 = vmatprep.subr.mxu0 0.0
      %1259 = vmatpush1.msra.mxu0 0.0
      %1260 = vmatprep.subr.mxu0 0.0
      %1261 = vmatpush1.msra.mxu0 0.0
      %1262 = vmatprep.subr.mxu0 0.0
      %1263 = vmatpush1.msra.mxu0 0.0
      %1264 = vmatprep.subr.mxu0 0.0
      %1265 = vmatpush1.msra.mxu0 0.0
      %1266 = vmatprep.subr.mxu0 0.0
      %1267 = vmatpush1.msra.mxu0 0.0
      %1268 = vmatprep.subr.mxu0 0.0
      %1269 = vmatpush1.msra.mxu0 0.0
      %1270 = vmatprep.subr.mxu0 0.0
      %1271 = vmatpush1.msra.mxu0 0.0
      %1272 = vmatprep.subr.mxu0 0.0
      %1273 = vmatpush1.msra.mxu0 0.0
      %1274 = vmatprep.subr.mxu0 0.0
      %1275 = vmatpush1.msra.mxu0 0.0
      %1276 = vmatprep.subr.mxu0 0.0
      %1277 = vmatpush1.msra.mxu0 0.0
      %1278 = vmatprep.subr.mxu0 0.0
      %1279 = vmatpush1.msra.mxu0 0.0
      %1280 = vmatprep.subr.mxu0 0.0
      %1281 = vmatpush1.msra.mxu0 0.0
      %1282 = vmatprep.subr.mxu0 0.0
      %1283 = vmatpush1.msra.mxu0 0.0
      %1284 = vmatprep.subr.mxu0 0.0
      %1285 = vmatpush1.msra.mxu0 0.0
      %1286 = vmatprep.subr.mxu0 0.0
      %1287 = vmatpush1.msra.mxu0 0.0
      %1288 = vmatprep.mubr.f32.mxu0 0.0
      %1289 = vmatmul.mubr.f32.gmra.mrb[0].mxu0 %v862
      %v1290 = vpop.f32.mrb[0].mxu0
      %v1291 = vadd.f32 0.0, %v1290
      %v1292 = vpop.f32.mrb[0].mxu0
      %1293 = vmatprep.mubr.f32.mxu0 0.0
      %1294 = vmatmul.mubr.f32.gmra.mrb[0].mxu0 %v865
      %v1295 = vpop.f32.mrb[0].mxu0
      %v1296 = vadd.f32 0.0, %v1295
      %v1297 = vpop.f32.mrb[0].mxu0
      %1298 = vmatprep.mubr.f32.mxu0 0.0
      %1299 = vmatmul.mubr.f32.gmra.mrb[0].mxu0 %v868
      %v1300 = vpop.f32.mrb[0].mxu0
      %v1301 = vadd.f32 0.0, %v1300
      %v1302 = vpop.f32.mrb[0].mxu0
      %1303 = vmatprep.mubr.f32.mxu0 0.0
      %1304 = vmatmul.mubr.f32.gmra.mrb[0].mxu0 %v871
      %v1305 = vpop.f32.mrb[0].mxu0
      %v1306 = vadd.f32 0.0, %v1305
      %v1307 = vpop.f32.mrb[0].mxu0
      %1308 = vmatprep.mubr.f32.mxu0 0.0
      %1309 = vmatmul.mubr.f32.gmra.mrb[0].mxu0 %v874
      %v1310 = vpop.f32.mrb[0].mxu0
      %v1311 = vadd.f32 0.0, %v1310
      %v1312 = vpop.f32.mrb[0].mxu0
      %1313 = vmatprep.mubr.f32.mxu0 0.0
      %1314 = vmatmul.mubr.f32.gmra.mrb[0].mxu0 %v877
      %v1315 = vpop.f32.mrb[0].mxu0
      %v1316 = vadd.f32 0.0, %v1315
      %v1317 = vpop.f32.mrb[0].mxu0
      %1318 = vmatprep.mubr.f32.mxu0 0.0
      %1319 = vmatmul.mubr.f32.gmra.mrb[0].mxu0 %v880
      %v1320 = vpop.f32.mrb[0].mxu0
      %v1321 = vadd.f32 0.0, %v1320
      %v1322 = vpop.f32.mrb[0].mxu0
      %1323 = vmatprep.mubr.f32.mxu0 0.0
      %1324 = vmatmul.mubr.f32.gmra.mrb[0].mxu0 %v883
      %v1325 = vpop.f32.mrb[0].mxu0
      %v1326 = vadd.f32 0.0, %v1325
      %v1327 = vpop.f32.mrb[0].mxu0
      %1328 = vmatprep.mubr.f32.mxu0 0.0
      %1329 = vmatmul.mubr.f32.gmra.mrb[0].mxu0 %v886
      %v1330 = vpop.f32.mrb[0].mxu0
      %v1331 = vadd.f32 0.0, %v1330
      %v1332 = vpop.f32.mrb[0].mxu0
      %1333 = vmatprep.mubr.f32.mxu0 0.0
      %1334 = vmatmul.mubr.f32.gmra.mrb[0].mxu0 %v889
      %v1335 = vpop.f32.mrb[0].mxu0
      %v1336 = vadd.f32 0.0, %v1335
      %v1337 = vpop.f32.mrb[0].mxu0
      %1338 = vmatprep.mubr.f32.mxu0 0.0
      %1339 = vmatmul.mubr.f32.gmra.mrb[0].mxu0 %v892
      %v1340 = vpop.f32.mrb[0].mxu0
      %v1341 = vadd.f32 0.0, %v1340
      %v1342 = vpop.f32.mrb[0].mxu0
      %1343 = vmatprep.mubr.f32.mxu0 0.0
      %1344 = vmatmul.mubr.f32.gmra.mrb[0].mxu0 %v895
      %v1345 = vpop.f32.mrb[0].mxu0
      %v1346 = vadd.f32 0.0, %v1345
      %v1347 = vpop.f32.mrb[0].mxu0
      %1348 = vmatprep.mubr.f32.mxu0 0.0
      %1349 = vmatmul.mubr.f32.gmra.mrb[0].mxu0 %v898
      %v1350 = vpop.f32.mrb[0].mxu0
      %v1351 = vadd.f32 0.0, %v1350
      %v1352 = vpop.f32.mrb[0].mxu0
      %1353 = vmatprep.mubr.f32.mxu0 0.0
      %1354 = vmatmul.mubr.f32.gmra.mrb[0].mxu0 %v901
      %v1355 = vpop.f32.mrb[0].mxu0
      %v1356 = vadd.f32 0.0, %v1355
      %v1357 = vpop.f32.mrb[0].mxu0
      %1358 = vmatprep.mubr.f32.mxu0 0.0
      %1359 = vmatmul.mubr.f32.gmra.mrb[0].mxu0 %v904
      %v1360 = vpop.f32.mrb[0].mxu0
      %v1361 = vadd.f32 0.0, %v1360
      %v1362 = vpop.f32.mrb[0].mxu0
      %1363 = vmatprep.mubr.f32.mxu0 0.0
      %1364 = vmatmul.mubr.f32.gmra.mrb[0].mxu0 %v907
      %v1365 = vpop.f32.mrb[0].mxu0
      %v1366 = vadd.f32 0.0, %v1365
      %v1367 = vpop.f32.mrb[0].mxu0
      %1368 = vmatprep.mubr.f32.mxu0 0.0
      %1369 = vmatmul.mubr.f32.gmra.mrb[0].mxu0 %v910
      %v1370 = vpop.f32.mrb[0].mxu0
      %v1371 = vadd.f32 0.0, %v1370
      %v1372 = vpop.f32.mrb[0].mxu0
      %1373 = vmatprep.mubr.f32.mxu0 0.0
      %1374 = vmatmul.mubr.f32.gmra.mrb[0].mxu0 %v913
      %v1375 = vpop.f32.mrb[0].mxu0
      %v1376 = vadd.f32 0.0, %v1375
      %v1377 = vpop.f32.mrb[0].mxu0
      %1378 = vmatprep.mubr.f32.mxu0 0.0
      %1379 = vmatmul.mubr.f32.gmra.mrb[0].mxu0 %v916
      %v1380 = vpop.f32.mrb[0].mxu0
      %v1381 = vadd.f32 0.0, %v1380
      %v1382 = vpop.f32.mrb[0].mxu0
      %1383 = vmatprep.mubr.f32.mxu0 0.0
      %1384 = vmatmul.mubr.f32.gmra.mrb[0].mxu0 %v919
      %v1385 = vpop.f32.mrb[0].mxu0
      %v1386 = vadd.f32 0.0, %v1385
      %v1387 = vpop.f32.mrb[0].mxu0
      %1388 = vmatprep.mubr.f32.mxu0 0.0
      %1389 = vmatmul.mubr.f32.gmra.mrb[0].mxu0 %v922
      %v1390 = vpop.f32.mrb[0].mxu0
      %v1391 = vadd.f32 0.0, %v1390
      %v1392 = vpop.f32.mrb[0].mxu0
      %1393 = vmatprep.mubr.f32.mxu0 0.0
      %1394 = vmatmul.mubr.f32.gmra.mrb[0].mxu0 %v925
      %v1395 = vpop.f32.mrb[0].mxu0
      %v1396 = vadd.f32 0.0, %v1395
      %v1397 = vpop.f32.mrb[0].mxu0
      %1398 = vmatprep.mubr.f32.mxu0 0.0
      %1399 = vmatmul.mubr.f32.gmra.mrb[0].mxu0 %v928
      %v1400 = vpop.f32.mrb[0].mxu0
      %v1401 = vadd.f32 0.0, %v1400
      %v1402 = vpop.f32.mrb[0].mxu0
      %1403 = vmatprep.mubr.f32.mxu0 0.0
      %1404 = vmatmul.mubr.f32.gmra.mrb[0].mxu0 %v931
      %v1405 = vpop.f32.mrb[0].mxu0
      %v1406 = vadd.f32 0.0, %v1405
      %v1407 = vpop.f32.mrb[0].mxu0
      %1408 = vmatprep.mubr.f32.mxu0 0.0
      %1409 = vmatmul.mubr.f32.gmra.mrb[0].mxu0 %v934
      %v1410 = vpop.f32.mrb[0].mxu0
      %v1411 = vadd.f32 0.0, %v1410
      %v1412 = vpop.f32.mrb[0].mxu0
      %1413 = vmatprep.mubr.f32.mxu0 0.0
      %1414 = vmatmul.mubr.f32.gmra.mrb[0].mxu0 %v937
      %v1415 = vpop.f32.mrb[0].mxu0
      %v1416 = vadd.f32 0.0, %v1415
      %v1417 = vpop.f32.mrb[0].mxu0
      %1418 = vmatprep.mubr.f32.mxu0 0.0
      %1419 = vmatmul.mubr.f32.gmra.mrb[0].mxu0 %v940
      %v1420 = vpop.f32.mrb[0].mxu0
      %v1421 = vadd.f32 0.0, %v1420
      %v1422 = vpop.f32.mrb[0].mxu0
      %1423 = vmatprep.mubr.f32.mxu0 0.0
      %1424 = vmatmul.mubr.f32.gmra.mrb[0].mxu0 %v943
      %v1425 = vpop.f32.mrb[0].mxu0
      %v1426 = vadd.f32 0.0, %v1425
      %v1427 = vpop.f32.mrb[0].mxu0
      %1428 = vmatprep.mubr.f32.mxu0 0.0
      %1429 = vmatmul.mubr.f32.gmra.mrb[0].mxu0 %v946
      %v1430 = vpop.f32.mrb[0].mxu0
      %v1431 = vadd.f32 0.0, %v1430
      %v1432 = vpop.f32.mrb[0].mxu0
      %1433 = vmatprep.mubr.f32.mxu0 0.0
      %1434 = vmatmul.mubr.f32.gmra.mrb[0].mxu0 %v949
      %v1435 = vpop.f32.mrb[0].mxu0
      %v1436 = vadd.f32 0.0, %v1435
      %v1437 = vpop.f32.mrb[0].mxu0
      %1438 = vmatprep.mubr.f32.mxu0 0.0
      %1439 = vmatmul.mubr.f32.gmra.mrb[0].mxu0 %v1216
      %v1440 = vpop.f32.mrb[0].mxu0
      %v1441 = vadd.f32 0.0, %v1440
      %v1442 = vpop.f32.mrb[0].mxu0
      %1443 = vmatprep.mubr.f32.mxu0 0.0
      %1444 = vmatmul.mubr.f32.gmra.mrb[0].mxu0 %v1219
      %v1445 = vpop.f32.mrb[0].mxu0
      %v1446 = vadd.f32 0.0, %v1445
      %v1447 = vpop.f32.mrb[0].mxu0
      %1448 = vdwg.mxu0
      %v1449 = vld [vmem:[#allocation2] sm:$0xff]
      %v1450 = vld [vmem:[#allocation2 + $0x8] sm:$0xff]
      %v1451 = vld [vmem:[#allocation2 + $0x10] sm:$0xff]
      %v1452 = vld [vmem:[#allocation2 + $0x18] sm:$0xff]
      %v1453 = vld [vmem:[#allocation2 + $0x20] sm:$0xff]
      %v1454 = vld [vmem:[#allocation2 + $0x28] sm:$0xff]
      %v1455 = vld [vmem:[#allocation2 + $0x30] sm:$0xff]
      %v1456 = vld [vmem:[#allocation2 + $0x38] sm:$0xff]
      %v1457 = vld [vmem:[#allocation2 + $0x40] sm:$0xff]
      %v1458 = vld [vmem:[#allocation2 + $0x48] sm:$0xff]
      %v1459 = vld [vmem:[#allocation2 + $0x50] sm:$0xff]
      %v1460 = vld [vmem:[#allocation2 + $0x58] sm:$0xff]
      %v1461 = vld [vmem:[#allocation2 + $0x60] sm:$0xff]
      %v1462 = vld [vmem:[#allocation2 + $0x68] sm:$0xff]
      %v1463 = vld [vmem:[#allocation2 + $0x70] sm:$0xff]
      %v1464 = vld [vmem:[#allocation2 + $0x78] sm:$0xff]
      %v1465 = vld [vmem:[#allocation2 + $0x80] sm:$0xff]
      %v1466 = vld [vmem:[#allocation2 + $0x88] sm:$0xff]
      %v1467 = vld [vmem:[#allocation2 + $0x90] sm:$0xff]
      %v1468 = vld [vmem:[#allocation2 + $0x98] sm:$0xff]
      %v1469 = vld [vmem:[#allocation2 + $0xa0] sm:$0xff]
      %v1470 = vld [vmem:[#allocation2 + $0xa8] sm:$0xff]
      %v1471 = vld [vmem:[#allocation2 + $0xb0] sm:$0xff]
      %v1472 = vld [vmem:[#allocation2 + $0xb8] sm:$0xff]
      %v1473 = vld [vmem:[#allocation2 + $0xc0] sm:$0xff]
      %v1474 = vld [vmem:[#allocation2 + $0xc8] sm:$0xff]
      %v1475 = vld [vmem:[#allocation2 + $0xd0] sm:$0xff]
      %v1476 = vld [vmem:[#allocation2 + $0xd8] sm:$0xff]
      %v1477 = vld [vmem:[#allocation2 + $0xe0] sm:$0xff]
      %v1478 = vld [vmem:[#allocation2 + $0xe8] sm:$0xff]
      %v1479 = vld [vmem:[#allocation2 + $0xf0] sm:$0xff]
      %v1480 = vld [vmem:[#allocation2 + $0xf8] sm:$0xff]
      %v1481 = vadd.f32 %v1449, %v1291
      %v1482 = vadd.f32 %v1450, %v1296
      %v1483 = vadd.f32 %v1451, %v1301
      %v1484 = vadd.f32 %v1452, %v1306
      %v1485 = vadd.f32 %v1453, %v1311
      %v1486 = vadd.f32 %v1454, %v1316
      %v1487 = vadd.f32 %v1455, %v1321
      %v1488 = vadd.f32 %v1456, %v1326
      %v1489 = vadd.f32 %v1457, %v1331
      %v1490 = vadd.f32 %v1458, %v1336
      %v1491 = vadd.f32 %v1459, %v1341
      %v1492 = vadd.f32 %v1460, %v1346
      %v1493 = vadd.f32 %v1461, %v1351
      %v1494 = vadd.f32 %v1462, %v1356
      %v1495 = vadd.f32 %v1463, %v1361
      %v1496 = vadd.f32 %v1464, %v1366
      %v1497 = vadd.f32 %v1465, %v1371
      %v1498 = vadd.f32 %v1466, %v1376
      %v1499 = vadd.f32 %v1467, %v1381
      %v1500 = vadd.f32 %v1468, %v1386
      %v1501 = vadd.f32 %v1469, %v1391
      %v1502 = vadd.f32 %v1470, %v1396
      %v1503 = vadd.f32 %v1471, %v1401
      %v1504 = vadd.f32 %v1472, %v1406
      %v1505 = vadd.f32 %v1473, %v1411
      %v1506 = vadd.f32 %v1474, %v1416
      %v1507 = vadd.f32 %v1475, %v1421
      %v1508 = vadd.f32 %v1476, %v1426
      %v1509 = vadd.f32 %v1477, %v1431
      %v1510 = vadd.f32 %v1478, %v1436
      %v1511 = vadd.f32 %v1479, %v1441
      %v1512 = vadd.f32 %v1480, %v1446
      %1513 = vst.msk [vmem:[#allocation2] sm:$0xff] %vm815, %v1481
      %1514 = vst.msk [vmem:[#allocation2 + $0x8] sm:$0xff] %vm815, %v1482
      %1515 = vst.msk [vmem:[#allocation2 + $0x10] sm:$0xff] %vm815, %v1483
      %1516 = vst.msk [vmem:[#allocation2 + $0x18] sm:$0xff] %vm815, %v1484
      %1517 = vst.msk [vmem:[#allocation2 + $0x20] sm:$0xff] %vm815, %v1485
      %1518 = vst.msk [vmem:[#allocation2 + $0x28] sm:$0xff] %vm815, %v1486
      %1519 = vst.msk [vmem:[#allocation2 + $0x30] sm:$0xff] %vm815, %v1487
      %1520 = vst.msk [vmem:[#allocation2 + $0x38] sm:$0xff] %vm815, %v1488
      %1521 = vst.msk [vmem:[#allocation2 + $0x40] sm:$0xff] %vm815, %v1489
      %1522 = vst.msk [vmem:[#allocation2 + $0x48] sm:$0xff] %vm815, %v1490
      %1523 = vst.msk [vmem:[#allocation2 + $0x50] sm:$0xff] %vm815, %v1491
      %1524 = vst.msk [vmem:[#allocation2 + $0x58] sm:$0xff] %vm815, %v1492
      %1525 = vst.msk [vmem:[#allocation2 + $0x60] sm:$0xff] %vm815, %v1493
      %1526 = vst.msk [vmem:[#allocation2 + $0x68] sm:$0xff] %vm815, %v1494
      %1527 = vst.msk [vmem:[#allocation2 + $0x70] sm:$0xff] %vm815, %v1495
      %1528 = vst.msk [vmem:[#allocation2 + $0x78] sm:$0xff] %vm815, %v1496
      %1529 = vst.msk [vmem:[#allocation2 + $0x80] sm:$0xff] %vm815, %v1497
      %1530 = vst.msk [vmem:[#allocation2 + $0x88] sm:$0xff] %vm815, %v1498
      %1531 = vst.msk [vmem:[#allocation2 + $0x90] sm:$0xff] %vm815, %v1499
      %1532 = vst.msk [vmem:[#allocation2 + $0x98] sm:$0xff] %vm815, %v1500
      %1533 = vst.msk [vmem:[#allocation2 + $0xa0] sm:$0xff] %vm815, %v1501
      %1534 = vst.msk [vmem:[#allocation2 + $0xa8] sm:$0xff] %vm815, %v1502
      %1535 = vst.msk [vmem:[#allocation2 + $0xb0] sm:$0xff] %vm815, %v1503
      %1536 = vst.msk [vmem:[#allocation2 + $0xb8] sm:$0xff] %vm815, %v1504
      %1537 = vst.msk [vmem:[#allocation2 + $0xc0] sm:$0xff] %vm815, %v1505
      %1538 = vst.msk [vmem:[#allocation2 + $0xc8] sm:$0xff] %vm815, %v1506
      %1539 = vst.msk [vmem:[#allocation2 + $0xd0] sm:$0xff] %vm815, %v1507
      %1540 = vst.msk [vmem:[#allocation2 + $0xd8] sm:$0xff] %vm815, %v1508
      %1541 = vst.msk [vmem:[#allocation2 + $0xe0] sm:$0xff] %vm815, %v1509
      %1542 = vst.msk [vmem:[#allocation2 + $0xe8] sm:$0xff] %vm815, %v1510
      %1543 = vst.msk [vmem:[#allocation2 + $0xf0] sm:$0xff] %vm815, %v1511
      %1544 = vst.msk [vmem:[#allocation2 + $0xf8] sm:$0xff] %vm815, %v1512
      %s1545 = scalar_lea.vmem %s2, 32
      %v1546 = vld [vmem:[%s1545] sm:$0xff]
      %v1547 = vld [vmem:[%s1545 + $0x8] sm:$0xf]
      %v1549 = vsel %vm854, %v850, 0
      %v1552 = vsel %vm854, %v851, 0
      %v1555 = vsel %vm951, %v1547, 0
      %1557 = vmatprep.subr.mxu0 0.0
      %1558 = vmatpush1.msra.mxu0 %v1546
      %1559 = vmatprep.subr.mxu0 0.0
      %1560 = vmatpush1.msra.mxu0 %v1555
      %1561 = vmatprep.subr.mxu0 0.0
      %1562 = vmatpush1.msra.mxu0 0.0
      %1563 = vmatprep.subr.mxu0 0.0
      %1564 = vmatpush1.msra.mxu0 0.0
      %1565 = vmatprep.subr.mxu0 0.0
      %1566 = vmatpush1.msra.mxu0 0.0
      %1567 = vmatprep.subr.mxu0 0.0
      %1568 = vmatpush1.msra.mxu0 0.0
      %1569 = vmatprep.subr.mxu0 0.0
      %1570 = vmatpush1.msra.mxu0 0.0
      %1571 = vmatprep.subr.mxu0 0.0
      %1572 = vmatpush1.msra.mxu0 0.0
      %1573 = vmatprep.subr.mxu0 0.0
      %1574 = vmatpush1.msra.mxu0 0.0
      %1575 = vmatprep.subr.mxu0 0.0
      %1576 = vmatpush1.msra.mxu0 0.0
      %1577 = vmatprep.subr.mxu0 0.0
      %1578 = vmatpush1.msra.mxu0 0.0
      %1579 = vmatprep.subr.mxu0 0.0
      %1580 = vmatpush1.msra.mxu0 0.0
      %1581 = vmatprep.subr.mxu0 0.0
      %1582 = vmatpush1.msra.mxu0 0.0
      %1583 = vmatprep.subr.mxu0 0.0
      %1584 = vmatpush1.msra.mxu0 0.0
      %1585 = vmatprep.subr.mxu0 0.0
      %1586 = vmatpush1.msra.mxu0 0.0
      %1587 = vmatprep.subr.mxu0 0.0
      %1588 = vmatpush1.msra.mxu0 0.0
      %1589 = vmatprep.subr.mxu0 0.0
      %1590 = vmatpush1.msra.mxu0 0.0
      %1591 = vmatprep.subr.mxu0 0.0
      %1592 = vmatpush1.msra.mxu0 0.0
      %1593 = vmatprep.subr.mxu0 0.0
      %1594 = vmatpush1.msra.mxu0 0.0
      %1595 = vmatprep.subr.mxu0 0.0
      %1596 = vmatpush1.msra.mxu0 0.0
      %1597 = vmatprep.subr.mxu0 0.0
      %1598 = vmatpush1.msra.mxu0 0.0
      %1599 = vmatprep.subr.mxu0 0.0
      %1600 = vmatpush1.msra.mxu0 0.0
      %1601 = vmatprep.subr.mxu0 0.0
      %1602 = vmatpush1.msra.mxu0 0.0
      %1603 = vmatprep.subr.mxu0 0.0
      %1604 = vmatpush1.msra.mxu0 0.0
      %1605 = vmatprep.subr.mxu0 0.0
      %1606 = vmatpush1.msra.mxu0 0.0
      %1607 = vmatprep.subr.mxu0 0.0
      %1608 = vmatpush1.msra.mxu0 0.0
      %1609 = vmatprep.subr.mxu0 0.0
      %1610 = vmatpush1.msra.mxu0 0.0
      %1611 = vmatprep.subr.mxu0 0.0
      %1612 = vmatpush1.msra.mxu0 0.0
      %1613 = vmatprep.subr.mxu0 0.0
      %1614 = vmatpush1.msra.mxu0 0.0
      %1615 = vmatprep.subr.mxu0 0.0
      %1616 = vmatpush1.msra.mxu0 0.0
      %1617 = vmatprep.subr.mxu0 0.0
      %1618 = vmatpush1.msra.mxu0 0.0
      %1619 = vmatprep.subr.mxu0 0.0
      %1620 = vmatpush1.msra.mxu0 0.0
      %1621 = vmatprep.mubr.f32.mxu0 0.0
      %1622 = vmatmul.mubr.f32.gmra.mrb[0].mxu0 %v868
      %v1623 = vpop.f32.mrb[0].mxu0
      %v1624 = vadd.f32 0.0, %v1623
      %v1625 = vpop.f32.mrb[0].mxu0
      %1626 = vmatprep.mubr.f32.mxu0 0.0
      %1627 = vmatmul.mubr.f32.gmra.mrb[0].mxu0 %v871
      %v1628 = vpop.f32.mrb[0].mxu0
      %v1629 = vadd.f32 0.0, %v1628
      %v1630 = vpop.f32.mrb[0].mxu0
      %1631 = vmatprep.mubr.f32.mxu0 0.0
      %1632 = vmatmul.mubr.f32.gmra.mrb[0].mxu0 %v874
      %v1633 = vpop.f32.mrb[0].mxu0
      %v1634 = vadd.f32 0.0, %v1633
      %v1635 = vpop.f32.mrb[0].mxu0
      %1636 = vmatprep.mubr.f32.mxu0 0.0
      %1637 = vmatmul.mubr.f32.gmra.mrb[0].mxu0 %v877
      %v1638 = vpop.f32.mrb[0].mxu0
      %v1639 = vadd.f32 0.0, %v1638
      %v1640 = vpop.f32.mrb[0].mxu0
      %1641 = vmatprep.mubr.f32.mxu0 0.0
      %1642 = vmatmul.mubr.f32.gmra.mrb[0].mxu0 %v880
      %v1643 = vpop.f32.mrb[0].mxu0
      %v1644 = vadd.f32 0.0, %v1643
      %v1645 = vpop.f32.mrb[0].mxu0
      %1646 = vmatprep.mubr.f32.mxu0 0.0
      %1647 = vmatmul.mubr.f32.gmra.mrb[0].mxu0 %v883
      %v1648 = vpop.f32.mrb[0].mxu0
      %v1649 = vadd.f32 0.0, %v1648
      %v1650 = vpop.f32.mrb[0].mxu0
      %1651 = vmatprep.mubr.f32.mxu0 0.0
      %1652 = vmatmul.mubr.f32.gmra.mrb[0].mxu0 %v886
      %v1653 = vpop.f32.mrb[0].mxu0
      %v1654 = vadd.f32 0.0, %v1653
      %v1655 = vpop.f32.mrb[0].mxu0
      %1656 = vmatprep.mubr.f32.mxu0 0.0
      %1657 = vmatmul.mubr.f32.gmra.mrb[0].mxu0 %v889
      %v1658 = vpop.f32.mrb[0].mxu0
      %v1659 = vadd.f32 0.0, %v1658
      %v1660 = vpop.f32.mrb[0].mxu0
      %1661 = vmatprep.mubr.f32.mxu0 0.0
      %1662 = vmatmul.mubr.f32.gmra.mrb[0].mxu0 %v892
      %v1663 = vpop.f32.mrb[0].mxu0
      %v1664 = vadd.f32 0.0, %v1663
      %v1665 = vpop.f32.mrb[0].mxu0
      %1666 = vmatprep.mubr.f32.mxu0 0.0
      %1667 = vmatmul.mubr.f32.gmra.mrb[0].mxu0 %v895
      %v1668 = vpop.f32.mrb[0].mxu0
      %v1669 = vadd.f32 0.0, %v1668
      %v1670 = vpop.f32.mrb[0].mxu0
      %1671 = vmatprep.mubr.f32.mxu0 0.0
      %1672 = vmatmul.mubr.f32.gmra.mrb[0].mxu0 %v898
      %v1673 = vpop.f32.mrb[0].mxu0
      %v1674 = vadd.f32 0.0, %v1673
      %v1675 = vpop.f32.mrb[0].mxu0
      %1676 = vmatprep.mubr.f32.mxu0 0.0
      %1677 = vmatmul.mubr.f32.gmra.mrb[0].mxu0 %v901
      %v1678 = vpop.f32.mrb[0].mxu0
      %v1679 = vadd.f32 0.0, %v1678
      %v1680 = vpop.f32.mrb[0].mxu0
      %1681 = vmatprep.mubr.f32.mxu0 0.0
      %1682 = vmatmul.mubr.f32.gmra.mrb[0].mxu0 %v904
      %v1683 = vpop.f32.mrb[0].mxu0
      %v1684 = vadd.f32 0.0, %v1683
      %v1685 = vpop.f32.mrb[0].mxu0
      %1686 = vmatprep.mubr.f32.mxu0 0.0
      %1687 = vmatmul.mubr.f32.gmra.mrb[0].mxu0 %v907
      %v1688 = vpop.f32.mrb[0].mxu0
      %v1689 = vadd.f32 0.0, %v1688
      %v1690 = vpop.f32.mrb[0].mxu0
      %1691 = vmatprep.mubr.f32.mxu0 0.0
      %1692 = vmatmul.mubr.f32.gmra.mrb[0].mxu0 %v910
      %v1693 = vpop.f32.mrb[0].mxu0
      %v1694 = vadd.f32 0.0, %v1693
      %v1695 = vpop.f32.mrb[0].mxu0
      %1696 = vmatprep.mubr.f32.mxu0 0.0
      %1697 = vmatmul.mubr.f32.gmra.mrb[0].mxu0 %v913
      %v1698 = vpop.f32.mrb[0].mxu0
      %v1699 = vadd.f32 0.0, %v1698
      %v1700 = vpop.f32.mrb[0].mxu0
      %1701 = vmatprep.mubr.f32.mxu0 0.0
      %1702 = vmatmul.mubr.f32.gmra.mrb[0].mxu0 %v916
      %v1703 = vpop.f32.mrb[0].mxu0
      %v1704 = vadd.f32 0.0, %v1703
      %v1705 = vpop.f32.mrb[0].mxu0
      %1706 = vmatprep.mubr.f32.mxu0 0.0
      %1707 = vmatmul.mubr.f32.gmra.mrb[0].mxu0 %v919
      %v1708 = vpop.f32.mrb[0].mxu0
      %v1709 = vadd.f32 0.0, %v1708
      %v1710 = vpop.f32.mrb[0].mxu0
      %1711 = vmatprep.mubr.f32.mxu0 0.0
      %1712 = vmatmul.mubr.f32.gmra.mrb[0].mxu0 %v922
      %v1713 = vpop.f32.mrb[0].mxu0
      %v1714 = vadd.f32 0.0, %v1713
      %v1715 = vpop.f32.mrb[0].mxu0
      %1716 = vmatprep.mubr.f32.mxu0 0.0
      %1717 = vmatmul.mubr.f32.gmra.mrb[0].mxu0 %v925
      %v1718 = vpop.f32.mrb[0].mxu0
      %v1719 = vadd.f32 0.0, %v1718
      %v1720 = vpop.f32.mrb[0].mxu0
      %1721 = vmatprep.mubr.f32.mxu0 0.0
      %1722 = vmatmul.mubr.f32.gmra.mrb[0].mxu0 %v928
      %v1723 = vpop.f32.mrb[0].mxu0
      %v1724 = vadd.f32 0.0, %v1723
      %v1725 = vpop.f32.mrb[0].mxu0
      %1726 = vmatprep.mubr.f32.mxu0 0.0
      %1727 = vmatmul.mubr.f32.gmra.mrb[0].mxu0 %v931
      %v1728 = vpop.f32.mrb[0].mxu0
      %v1729 = vadd.f32 0.0, %v1728
      %v1730 = vpop.f32.mrb[0].mxu0
      %1731 = vmatprep.mubr.f32.mxu0 0.0
      %1732 = vmatmul.mubr.f32.gmra.mrb[0].mxu0 %v934
      %v1733 = vpop.f32.mrb[0].mxu0
      %v1734 = vadd.f32 0.0, %v1733
      %v1735 = vpop.f32.mrb[0].mxu0
      %1736 = vmatprep.mubr.f32.mxu0 0.0
      %1737 = vmatmul.mubr.f32.gmra.mrb[0].mxu0 %v937
      %v1738 = vpop.f32.mrb[0].mxu0
      %v1739 = vadd.f32 0.0, %v1738
      %v1740 = vpop.f32.mrb[0].mxu0
      %1741 = vmatprep.mubr.f32.mxu0 0.0
      %1742 = vmatmul.mubr.f32.gmra.mrb[0].mxu0 %v940
      %v1743 = vpop.f32.mrb[0].mxu0
      %v1744 = vadd.f32 0.0, %v1743
      %v1745 = vpop.f32.mrb[0].mxu0
      %1746 = vmatprep.mubr.f32.mxu0 0.0
      %1747 = vmatmul.mubr.f32.gmra.mrb[0].mxu0 %v943
      %v1748 = vpop.f32.mrb[0].mxu0
      %v1749 = vadd.f32 0.0, %v1748
      %v1750 = vpop.f32.mrb[0].mxu0
      %1751 = vmatprep.mubr.f32.mxu0 0.0
      %1752 = vmatmul.mubr.f32.gmra.mrb[0].mxu0 %v946
      %v1753 = vpop.f32.mrb[0].mxu0
      %v1754 = vadd.f32 0.0, %v1753
      %v1755 = vpop.f32.mrb[0].mxu0
      %1756 = vmatprep.mubr.f32.mxu0 0.0
      %1757 = vmatmul.mubr.f32.gmra.mrb[0].mxu0 %v949
      %v1758 = vpop.f32.mrb[0].mxu0
      %v1759 = vadd.f32 0.0, %v1758
      %v1760 = vpop.f32.mrb[0].mxu0
      %1761 = vmatprep.mubr.f32.mxu0 0.0
      %1762 = vmatmul.mubr.f32.gmra.mrb[0].mxu0 %v1216
      %v1763 = vpop.f32.mrb[0].mxu0
      %v1764 = vadd.f32 0.0, %v1763
      %v1765 = vpop.f32.mrb[0].mxu0
      %1766 = vmatprep.mubr.f32.mxu0 0.0
      %1767 = vmatmul.mubr.f32.gmra.mrb[0].mxu0 %v1219
      %v1768 = vpop.f32.mrb[0].mxu0
      %v1769 = vadd.f32 0.0, %v1768
      %v1770 = vpop.f32.mrb[0].mxu0
      %1771 = vmatprep.mubr.f32.mxu0 0.0
      %1772 = vmatmul.mubr.f32.gmra.mrb[0].mxu0 %v1549
      %v1773 = vpop.f32.mrb[0].mxu0
      %v1774 = vadd.f32 0.0, %v1773
      %v1775 = vpop.f32.mrb[0].mxu0
      %1776 = vmatprep.mubr.f32.mxu0 0.0
      %1777 = vmatmul.mubr.f32.gmra.mrb[0].mxu0 %v1552
      %v1778 = vpop.f32.mrb[0].mxu0
      %v1779 = vadd.f32 0.0, %v1778
      %v1780 = vpop.f32.mrb[0].mxu0
      %1781 = vdwg.mxu0
      %v1782 = vld [vmem:[#allocation2] sm:$0xff]
      %v1783 = vld [vmem:[#allocation2 + $0x8] sm:$0xff]
      %v1784 = vld [vmem:[#allocation2 + $0x10] sm:$0xff]
      %v1785 = vld [vmem:[#allocation2 + $0x18] sm:$0xff]
      %v1786 = vld [vmem:[#allocation2 + $0x20] sm:$0xff]
      %v1787 = vld [vmem:[#allocation2 + $0x28] sm:$0xff]
      %v1788 = vld [vmem:[#allocation2 + $0x30] sm:$0xff]
      %v1789 = vld [vmem:[#allocation2 + $0x38] sm:$0xff]
      %v1790 = vld [vmem:[#allocation2 + $0x40] sm:$0xff]
      %v1791 = vld [vmem:[#allocation2 + $0x48] sm:$0xff]
      %v1792 = vld [vmem:[#allocation2 + $0x50] sm:$0xff]
      %v1793 = vld [vmem:[#allocation2 + $0x58] sm:$0xff]
      %v1794 = vld [vmem:[#allocation2 + $0x60] sm:$0xff]
      %v1795 = vld [vmem:[#allocation2 + $0x68] sm:$0xff]
      %v1796 = vld [vmem:[#allocation2 + $0x70] sm:$0xff]
      %v1797 = vld [vmem:[#allocation2 + $0x78] sm:$0xff]
      %v1798 = vld [vmem:[#allocation2 + $0x80] sm:$0xff]
      %v1799 = vld [vmem:[#allocation2 + $0x88] sm:$0xff]
      %v1800 = vld [vmem:[#allocation2 + $0x90] sm:$0xff]
      %v1801 = vld [vmem:[#allocation2 + $0x98] sm:$0xff]
      %v1802 = vld [vmem:[#allocation2 + $0xa0] sm:$0xff]
      %v1803 = vld [vmem:[#allocation2 + $0xa8] sm:$0xff]
      %v1804 = vld [vmem:[#allocation2 + $0xb0] sm:$0xff]
      %v1805 = vld [vmem:[#allocation2 + $0xb8] sm:$0xff]
      %v1806 = vld [vmem:[#allocation2 + $0xc0] sm:$0xff]
      %v1807 = vld [vmem:[#allocation2 + $0xc8] sm:$0xff]
      %v1808 = vld [vmem:[#allocation2 + $0xd0] sm:$0xff]
      %v1809 = vld [vmem:[#allocation2 + $0xd8] sm:$0xff]
      %v1810 = vld [vmem:[#allocation2 + $0xe0] sm:$0xff]
      %v1811 = vld [vmem:[#allocation2 + $0xe8] sm:$0xff]
      %v1812 = vld [vmem:[#allocation2 + $0xf0] sm:$0xff]
      %v1813 = vld [vmem:[#allocation2 + $0xf8] sm:$0xff]
      %v1814 = vadd.f32 %v1782, %v1624
      %v1815 = vadd.f32 %v1783, %v1629
      %v1816 = vadd.f32 %v1784, %v1634
      %v1817 = vadd.f32 %v1785, %v1639
      %v1818 = vadd.f32 %v1786, %v1644
      %v1819 = vadd.f32 %v1787, %v1649
      %v1820 = vadd.f32 %v1788, %v1654
      %v1821 = vadd.f32 %v1789, %v1659
      %v1822 = vadd.f32 %v1790, %v1664
      %v1823 = vadd.f32 %v1791, %v1669
      %v1824 = vadd.f32 %v1792, %v1674
      %v1825 = vadd.f32 %v1793, %v1679
      %v1826 = vadd.f32 %v1794, %v1684
      %v1827 = vadd.f32 %v1795, %v1689
      %v1828 = vadd.f32 %v1796, %v1694
      %v1829 = vadd.f32 %v1797, %v1699
      %v1830 = vadd.f32 %v1798, %v1704
      %v1831 = vadd.f32 %v1799, %v1709
      %v1832 = vadd.f32 %v1800, %v1714
      %v1833 = vadd.f32 %v1801, %v1719
      %v1834 = vadd.f32 %v1802, %v1724
      %v1835 = vadd.f32 %v1803, %v1729
      %v1836 = vadd.f32 %v1804, %v1734
      %v1837 = vadd.f32 %v1805, %v1739
      %v1838 = vadd.f32 %v1806, %v1744
      %v1839 = vadd.f32 %v1807, %v1749
      %v1840 = vadd.f32 %v1808, %v1754
      %v1841 = vadd.f32 %v1809, %v1759
      %v1842 = vadd.f32 %v1810, %v1764
      %v1843 = vadd.f32 %v1811, %v1769
      %v1844 = vadd.f32 %v1812, %v1774
      %v1845 = vadd.f32 %v1813, %v1779
      %1846 = vst.msk [vmem:[#allocation2] sm:$0xff] %vm815, %v1814
      %1847 = vst.msk [vmem:[#allocation2 + $0x8] sm:$0xff] %vm815, %v1815
      %1848 = vst.msk [vmem:[#allocation2 + $0x10] sm:$0xff] %vm815, %v1816
      %1849 = vst.msk [vmem:[#allocation2 + $0x18] sm:$0xff] %vm815, %v1817
      %1850 = vst.msk [vmem:[#allocation2 + $0x20] sm:$0xff] %vm815, %v1818
      %1851 = vst.msk [vmem:[#allocation2 + $0x28] sm:$0xff] %vm815, %v1819
      %1852 = vst.msk [vmem:[#allocation2 + $0x30] sm:$0xff] %vm815, %v1820
      %1853 = vst.msk [vmem:[#allocation2 + $0x38] sm:$0xff] %vm815, %v1821
      %1854 = vst.msk [vmem:[#allocation2 + $0x40] sm:$0xff] %vm815, %v1822
      %1855 = vst.msk [vmem:[#allocation2 + $0x48] sm:$0xff] %vm815, %v1823
      %1856 = vst.msk [vmem:[#allocation2 + $0x50] sm:$0xff] %vm815, %v1824
      %1857 = vst.msk [vmem:[#allocation2 + $0x58] sm:$0xff] %vm815, %v1825
      %1858 = vst.msk [vmem:[#allocation2 + $0x60] sm:$0xff] %vm815, %v1826
      %1859 = vst.msk [vmem:[#allocation2 + $0x68] sm:$0xff] %vm815, %v1827
      %1860 = vst.msk [vmem:[#allocation2 + $0x70] sm:$0xff] %vm815, %v1828
      %1861 = vst.msk [vmem:[#allocation2 + $0x78] sm:$0xff] %vm815, %v1829
      %1862 = vst.msk [vmem:[#allocation2 + $0x80] sm:$0xff] %vm815, %v1830
      %1863 = vst.msk [vmem:[#allocation2 + $0x88] sm:$0xff] %vm815, %v1831
      %1864 = vst.msk [vmem:[#allocation2 + $0x90] sm:$0xff] %vm815, %v1832
      %1865 = vst.msk [vmem:[#allocation2 + $0x98] sm:$0xff] %vm815, %v1833
      %1866 = vst.msk [vmem:[#allocation2 + $0xa0] sm:$0xff] %vm815, %v1834
      %1867 = vst.msk [vmem:[#allocation2 + $0xa8] sm:$0xff] %vm815, %v1835
      %1868 = vst.msk [vmem:[#allocation2 + $0xb0] sm:$0xff] %vm815, %v1836
      %1869 = vst.msk [vmem:[#allocation2 + $0xb8] sm:$0xff] %vm815, %v1837
      %1870 = vst.msk [vmem:[#allocation2 + $0xc0] sm:$0xff] %vm815, %v1838
      %1871 = vst.msk [vmem:[#allocation2 + $0xc8] sm:$0xff] %vm815, %v1839
      %1872 = vst.msk [vmem:[#allocation2 + $0xd0] sm:$0xff] %vm815, %v1840
      %1873 = vst.msk [vmem:[#allocation2 + $0xd8] sm:$0xff] %vm815, %v1841
      %1874 = vst.msk [vmem:[#allocation2 + $0xe0] sm:$0xff] %vm815, %v1842
      %1875 = vst.msk [vmem:[#allocation2 + $0xe8] sm:$0xff] %vm815, %v1843
      %1876 = vst.msk [vmem:[#allocation2 + $0xf0] sm:$0xff] %vm815, %v1844
      %1877 = vst.msk [vmem:[#allocation2 + $0xf8] sm:$0xff] %vm815, %v1845
      %v1878 = vld [vmem:[#allocation2] sm:$0xff]
      %v1879 = vld [vmem:[#allocation2 + $0x8] sm:$0xff]
      %v1880 = vld [vmem:[#allocation2 + $0x10] sm:$0xff]
      %v1881 = vld [vmem:[#allocation2 + $0x18] sm:$0xff]
      %v1882 = vld [vmem:[#allocation2 + $0x20] sm:$0xff]
      %v1883 = vld [vmem:[#allocation2 + $0x28] sm:$0xff]
      %v1884 = vld [vmem:[#allocation2 + $0x30] sm:$0xff]
      %v1885 = vld [vmem:[#allocation2 + $0x38] sm:$0xff]
      %v1886 = vld [vmem:[#allocation2 + $0x40] sm:$0xff]
      %v1887 = vld [vmem:[#allocation2 + $0x48] sm:$0xff]
      %v1888 = vld [vmem:[#allocation2 + $0x50] sm:$0xff]
      %v1889 = vld [vmem:[#allocation2 + $0x58] sm:$0xff]
      %v1890 = vld [vmem:[#allocation2 + $0x60] sm:$0xff]
      %v1891 = vld [vmem:[#allocation2 + $0x68] sm:$0xff]
      %v1892 = vld [vmem:[#allocation2 + $0x70] sm:$0xff]
      %v1893 = vld [vmem:[#allocation2 + $0x78] sm:$0xff]
      %v1894 = vld [vmem:[#allocation2 + $0x80] sm:$0xff]
      %v1895 = vld [vmem:[#allocation2 + $0x88] sm:$0xff]
      %v1896 = vld [vmem:[#allocation2 + $0x90] sm:$0xff]
      %v1897 = vld [vmem:[#allocation2 + $0x98] sm:$0xff]
      %v1898 = vld [vmem:[#allocation2 + $0xa0] sm:$0xff]
      %v1899 = vld [vmem:[#allocation2 + $0xa8] sm:$0xff]
      %v1900 = vld [vmem:[#allocation2 + $0xb0] sm:$0xff]
      %v1901 = vld [vmem:[#allocation2 + $0xb8] sm:$0xff]
      %v1902 = vld [vmem:[#allocation2 + $0xc0] sm:$0xff]
      %v1903 = vld [vmem:[#allocation2 + $0xc8] sm:$0xff]
      %v1904 = vld [vmem:[#allocation2 + $0xd0] sm:$0xff]
      %v1905 = vld [vmem:[#allocation2 + $0xd8] sm:$0xff]
      %v1906 = vld [vmem:[#allocation2 + $0xe0] sm:$0xff]
      %v1907 = vld [vmem:[#allocation2 + $0xe8] sm:$0xff]
      %v1908 = vld [vmem:[#allocation2 + $0xf0] sm:$0xff]
      %v1909 = vld [vmem:[#allocation2 + $0xf8] sm:$0xff]
      %1910 = vst.msk [vmem:[%s270] sm:$0xff] %vm815, %v1878
      %1911 = vst.msk [vmem:[%s270 + $0x8] sm:$0xff] %vm815, %v1879
      %1912 = vst.msk [vmem:[%s270 + $0x10] sm:$0xff] %vm815, %v1880
      %1913 = vst.msk [vmem:[%s270 + $0x18] sm:$0xff] %vm815, %v1881
      %1914 = vst.msk [vmem:[%s270 + $0x20] sm:$0xff] %vm815, %v1882
      %1915 = vst.msk [vmem:[%s270 + $0x28] sm:$0xff] %vm815, %v1883
      %1916 = vst.msk [vmem:[%s270 + $0x30] sm:$0xff] %vm815, %v1884
      %1917 = vst.msk [vmem:[%s270 + $0x38] sm:$0xff] %vm815, %v1885
      %1918 = vst.msk [vmem:[%s270 + $0x40] sm:$0xff] %vm815, %v1886
      %1919 = vst.msk [vmem:[%s270 + $0x48] sm:$0xff] %vm815, %v1887
      %1920 = vst.msk [vmem:[%s270 + $0x50] sm:$0xff] %vm815, %v1888
      %1921 = vst.msk [vmem:[%s270 + $0x58] sm:$0xff] %vm815, %v1889
      %1922 = vst.msk [vmem:[%s270 + $0x60] sm:$0xff] %vm815, %v1890
      %1923 = vst.msk [vmem:[%s270 + $0x68] sm:$0xff] %vm815, %v1891
      %1924 = vst.msk [vmem:[%s270 + $0x70] sm:$0xff] %vm815, %v1892
      %1925 = vst.msk [vmem:[%s270 + $0x78] sm:$0xff] %vm815, %v1893
      %1926 = vst.msk [vmem:[%s270 + $0x80] sm:$0xff] %vm815, %v1894
      %1927 = vst.msk [vmem:[%s270 + $0x88] sm:$0xff] %vm815, %v1895
      %1928 = vst.msk [vmem:[%s270 + $0x90] sm:$0xff] %vm815, %v1896
      %1929 = vst.msk [vmem:[%s270 + $0x98] sm:$0xff] %vm815, %v1897
      %1930 = vst.msk [vmem:[%s270 + $0xa0] sm:$0xff] %vm815, %v1898
      %1931 = vst.msk [vmem:[%s270 + $0xa8] sm:$0xff] %vm815, %v1899
      %1932 = vst.msk [vmem:[%s270 + $0xb0] sm:$0xff] %vm815, %v1900
      %1933 = vst.msk [vmem:[%s270 + $0xb8] sm:$0xff] %vm815, %v1901
      %1934 = vst.msk [vmem:[%s270 + $0xc0] sm:$0xff] %vm815, %v1902
      %1935 = vst.msk [vmem:[%s270 + $0xc8] sm:$0xff] %vm815, %v1903
      %1936 = vst.msk [vmem:[%s270 + $0xd0] sm:$0xff] %vm815, %v1904
      %1937 = vst.msk [vmem:[%s270 + $0xd8] sm:$0xff] %vm815, %v1905
      %1938 = vst.msk [vmem:[%s270 + $0xe0] sm:$0xff] %vm815, %v1906
      %1939 = vst.msk [vmem:[%s270 + $0xe8] sm:$0xff] %vm815, %v1907
      %1940 = vst.msk [vmem:[%s270 + $0xf0] sm:$0xff] %vm815, %v1908
      %1941 = vst.msk [vmem:[%s270 + $0xf8] sm:$0xff] %vm815, %v1909
      %s1942 = smul.u32 32, %s19
      %p1943 = scmp.lt.s32.totalorder %s18, 1
      %s1944 = scalar_select %p1943, %s18, 1
      %p1945 = scmp.lt.s32.totalorder %s1942, 31
      %s1946 = scalar_select %p1945, %s1942, 31
      %s1947 = smul.addr %s1944, 32
      %s1948 = sadd.s32 %s1946, %s1947
      %s1949 = smul.addr %s1948, 8
      %s1950 = scalar_lea.vmem %s3, %s1949
      // Predicated region
      $region33: #{tpu_custom_call.1} parent=31 // pred_check
        %p1951 = pneg %p123
      $region34: #{tpu_custom_call.1} parent=31 // pred_check_branch
        %1953 = sbr.rel (%p1951) target = $region36
      $region35: #{tpu_custom_call.1} parent=31 // pred_region
        %s1954 = smul.u32 32, %s19
      $region36: #{tpu_custom_call.1} parent=31 // pred_fallthru
        _
    $region32: #{tpu_custom_call.1} parent=5 // pred_fallthru
      _
    %p1955 = scmp.le.s32.totalorder 2, %s9
    // Predicated region
    $region37: #{tpu_custom_call.1} parent=5 // pred_check
      %p1956 = pneg %p1955
    $region38: #{tpu_custom_call.1} parent=5 // pred_check_branch
      %1958 = sbr.rel (%p1956) target = $region40
    $region39: #{tpu_custom_call.1} parent=5 // pred_region
      %s1959 = ssub.s32 %s9, 2
      // Predicated region
      $region41: #{tpu_custom_call.1} parent=39 // pred_check
        %p1960 = pneg %p129
      $region42: #{tpu_custom_call.1} parent=39 // pred_check_branch
        %1962 = sbr.rel (%p1960) target = $region44
      $region43: #{tpu_custom_call.1} parent=39 // pred_region
        %s1963 = smul.u32 32, %s21
        %p1964 = scmp.lt.s32.totalorder %s20, 1
        %s1965 = scalar_select %p1964, %s20, 1
        %p1966 = scmp.lt.s32.totalorder %s1963, 31
        %s1967 = scalar_select %p1966, %s1963, 31
        %s1968 = smul.addr %s1965, 32
        %s1969 = sadd.s32 %s1967, %s1968
        %s1970 = smul.addr %s1969, 8
        %s1971 = scalar_lea.vmem %s3, %s1970
      $region44: #{tpu_custom_call.1} parent=39 // pred_fallthru
        _
    $region40: #{tpu_custom_call.1} parent=5 // pred_fallthru
      _
  $region6: #{tpu_custom_call.1} parent=0 // loop_footer
    %s13 = sadd.s32 1, %s9
  $region7: #{tpu_custom_call.1} parent=0 // loop_footer_branch
    %8 = sbr.rel target = $region3
  $region8: #{tpu_custom_call.1} parent=0 // loop_exit
    _

</llo_original>
